<compile_context>
chip_gen: v5e
topology: v5e:2x2
jax: 0.10.0
libtpu: 0.0.40
codegen_flags: <defaults>
</compile_context>

<pallas_src>
import math
import functools

import jax
import jax.numpy as jnp
from jax import lax
from jax.experimental import pallas as pl
from jax.experimental.pallas import tpu as pltpu


def _styled_conv2d_kernel(K, H, W, C_in, C_out,
                          xpad_ref, wmod_ref, w_pw_ref, noise_ref, bias_ref,
                          out_ref):
    """One grid step == one batch element.

    xpad_ref : (1, H+2p, W+2p, C_in)  zero-padded NHWC input
    wmod_ref : (1, K*K, C_in)         per-batch style-modulated depthwise taps
    w_pw_ref : (C_in, C_out)          pointwise weight with demodulation folded in
    noise_ref: (1, H*W, 1)            noise pre-scaled by noise_weight
    bias_ref : (1, C_out)             conv bias
    out_ref  : (1, H*W, C_out)
    """
    wm = wmod_ref[0]                                              # (K*K, C_in)

    # --- depthwise KxK conv with modulation folded into the taps (VPU) ---
    acc = jnp.zeros((H, W, C_in), jnp.float32)
    for dy in range(K):
        for dx in range(K):
            i = dy * K + dx
            win = xpad_ref[0, pl.ds(dy, H), pl.ds(dx, W), :]      # (H, W, C_in)
            acc = acc + win * wm[i:i + 1, :]                      # (1, C_in) bcast

    # --- pointwise 1x1 conv as a single MXU matmul over C_in ---
    y = jnp.dot(acc.reshape(H * W, C_in), w_pw_ref[...],
                preferred_element_type=jnp.float32)               # (H*W, C_out)

    # --- noise (pre-scaled), bias, LeakyReLU(0.2) ---
    y = y + noise_ref[0]                                          # (H*W, 1) bcast
    y = y + bias_ref[...]                                         # (1, C_out) bcast
    out_ref[0] = jnp.where(y >= 0, y, 0.2 * y).astype(out_ref.dtype)


def styled_conv2d_forward(x_nchw, style, params, noise_nchw):
    """x_nchw: (B, C_in, H, W); style: (B, S); noise_nchw: (B, 1, H, W)."""
    B, C_in, H, W = x_nchw.shape
    weight_dw = params["weight_dw"]                 # (C_in, 1, K, K)
    weight_permute = params["weight_permute"]       # (C_out, C_in, 1, 1)
    K = weight_dw.shape[-1]
    C_out = weight_permute.shape[0]
    pad = K // 2
    scale = 1.0 / math.sqrt(C_in * K * K)

    # ---- tiny per-batch / weight-only precompute, hoisted out of the kernel ----
    # style modulation for the whole batch: one (B,S)x(S,C_in) matmul
    mod = scale * (style @ params["mod_w"].T + params["mod_b"])          # (B, C_in)
    # fold modulation into the depthwise taps: (B, K*K, C_in)
    w_dw_flat = jnp.transpose(weight_dw[:, 0], (1, 2, 0)).reshape(K * K, C_in)
    wmod = mod[:, None, :] * w_dw_flat[None]                             # (B, KK, C_in)
    # demodulation depends only on the weights -> fold into the pointwise weight
    w_pw = weight_permute[:, :, 0, 0]                                    # (C_out, C_in)
    w_full = weight_dw[:, 0][None] * w_pw[:, :, None, None]
    demod = lax.rsqrt(jnp.sum((scale * w_full) ** 2, axis=(1, 2, 3)) + 1e-8)
    w_pw_eff = w_pw.T * demod[None, :]                                   # (C_in, C_out)
    # pre-scale noise by noise_weight; (B,1,H,W) -> (B, H*W, 1) is a free reshape
    noise_s = params["noise_weight"][0] * noise_nchw.reshape(B, H * W, 1)
    bias2 = params["bias"].reshape(1, C_out)

    # Activations: NCHW -> NHWC + zero pad (in an NHWC-native model these two
    # relayouts disappear; padding could also move in-kernel via masked halo taps).
    x_nhwc = jnp.transpose(x_nchw, (0, 2, 3, 1))
    x_pad = jnp.pad(x_nhwc, ((0, 0), (pad, pad), (pad, pad), (0, 0)))
    Hp, Wp = H + 2 * pad, W + 2 * pad

    kernel = functools.partial(_styled_conv2d_kernel, K, H, W, C_in, C_out)

    out_flat = pl.pallas_call(
        kernel,
        out_shape=jax.ShapeDtypeStruct((B, H * W, C_out), jnp.float32),
        grid=(B,),
        in_specs=[
            pl.BlockSpec((1, Hp, Wp, C_in), lambda b: (b, 0, 0, 0)),   # padded input
            pl.BlockSpec((1, K * K, C_in), lambda b: (b, 0, 0)),       # modulated taps
            pl.BlockSpec((C_in, C_out), lambda b: (0, 0)),             # pw weight (demod folded)
            pl.BlockSpec((1, H * W, 1), lambda b: (b, 0, 0)),          # pre-scaled noise
            pl.BlockSpec((1, C_out), lambda b: (0, 0)),                # bias
        ],
        out_specs=pl.BlockSpec((1, H * W, C_out), lambda b: (b, 0, 0)),
        compiler_params=pltpu.CompilerParams(
            dimension_semantics=("parallel",),
            vmem_limit_bytes=64 * 1024 * 1024,
        ),
    )(x_pad, wmod, w_pw_eff, noise_s, bias2)

    # (B, H*W, C_out) -> (B, C_out, H, W)
    return jnp.transpose(out_flat.reshape(B, H, W, C_out), (0, 3, 1, 2))


def ref_forward(x, style, params, noise):
    """Pure-JAX reference (NCHW, mirrors the PyTorch module)."""
    B, C_in, H, W = x.shape
    weight_dw = params["weight_dw"]
    weight_permute = params["weight_permute"]
    K = weight_dw.shape[-1]
    C_out = weight_permute.shape[0]
    scale = 1.0 / math.sqrt(C_in * K * K)

    mod = scale * (style @ params["mod_w"].T + params["mod_b"])         # (B, C_in)
    xm = x * mod[:, :, None, None]
    dw = lax.conv_general_dilated(xm, weight_dw, (1, 1),
                                  [(K // 2, K // 2), (K // 2, K // 2)],
                                  dimension_numbers=("NCHW", "OIHW", "NCHW"),
                                  feature_group_count=C_in)
    pw = lax.conv_general_dilated(dw, weight_permute, (1, 1), "VALID",
                                  dimension_numbers=("NCHW", "OIHW", "NCHW"))
    w_full = weight_dw[:, 0][None] * weight_permute[:, :, 0, 0][:, :, None, None]
    demod = lax.rsqrt(jnp.sum((scale * w_full) ** 2, axis=(1, 2, 3)) + 1e-8)
    y = pw * demod[None, :, None, None]
    y = y + params["noise_weight"][0] * noise
    y = y + params["bias"]
    return jnp.where(y >= 0, y, 0.2 * y)


if __name__ == "__main__":
    B, C_in, C_out, S, H, W, K = 2, 4, 8, 8, 16, 16, 3
    key = jax.random.PRNGKey(0)
    ks = jax.random.split(key, 8)

    x = jax.random.normal(ks[0], (B, C_in, H, W), jnp.float32)
    style = jax.random.normal(ks[1], (B, S), jnp.float32)
    # explicit noise input (the `noise is None` branch of NoiseInjection would
    # just sample standard-normal noise of this same shape on the host)
    noise = jax.random.normal(ks[2], (B, 1, H, W), jnp.float32)

    # Deterministic parameter init (torch inits bias / noise_weight to zero; we
    # use nonzero values so those code paths are actually exercised).
    params = dict(
        weight_dw=jax.random.normal(ks[3], (C_in, 1, K, K), jnp.float32),
        weight_permute=jax.random.normal(ks[4], (C_out, C_in, 1, 1), jnp.float32),
        mod_w=jax.random.normal(ks[5], (C_in, S), jnp.float32) * 0.1,   # Linear weight
        mod_b=jnp.ones((C_in,), jnp.float32),                           # Linear bias
        noise_weight=jnp.full((1,), 0.1, jnp.float32),
        bias=jax.random.normal(ks[6], (1, C_out, 1, 1), jnp.float32) * 0.1,
    )

    out = styled_conv2d_forward(x, style, params, noise)
    out = jax.block_until_ready(out)

    ref = ref_forward(x, style, params, noise)
    assert out.shape == (B, C_out, H, W)
    assert jnp.allclose(out, ref, atol=1e-4, rtol=1e-4), float(jnp.max(jnp.abs(out - ref)))
    print("KERNEL_OK")
</pallas_src>

<mosaic_0001>
module attributes {stable_mosaic.version = 11 : i64} {
  func.func @_styled_conv2d_kernel(%arg0: i32, %arg1: memref<1x18x18x4xf32, #tpu.memory_space<vmem>>, %arg2: memref<1x9x4xf32, #tpu.memory_space<vmem>>, %arg3: memref<4x8xf32, #tpu.memory_space<vmem>>, %arg4: memref<1x256x1xf32, #tpu.memory_space<vmem>>, %arg5: memref<1x8xf32, #tpu.memory_space<vmem>>, %arg6: memref<1x256x8xf32, #tpu.memory_space<vmem>>) attributes {dimension_semantics = [#tpu.dimension_semantics<parallel>], iteration_bounds = array<i64: 2>, scalar_prefetch = 0 : i64, scratch_operands = 0 : i64, tpu.core_type = #tpu.core_type<tc>, window_params = [{transform_indices = @transform_0, window_bounds = array<i64: 1, 18, 18, 4>}, {transform_indices = @transform_1, window_bounds = array<i64: 1, 9, 4>}, {pipeline_mode = #tpu.pipeline_mode<synchronous>, transform_indices = @transform_2, window_bounds = array<i64: 4, 8>}, {transform_indices = @transform_3, window_bounds = array<i64: 1, 256, 1>}, {pipeline_mode = #tpu.pipeline_mode<synchronous>, transform_indices = @transform_4, window_bounds = array<i64: 1, 8>}, {transform_indices = @transform_5, window_bounds = array<i64: 1, 256, 8>}]} {
    %c0 = arith.constant 0 : index
    %c0_0 = arith.constant 0 : index
    %c0_1 = arith.constant 0 : index
    %0 = vector.load %arg2[%c0, %c0_0, %c0_1] : memref<1x9x4xf32, #tpu.memory_space<vmem>>, vector<1x9x4xf32>
    %1 = vector.shape_cast %0 : vector<1x9x4xf32> to vector<9x4xf32>
    %cst = arith.constant 0.000000e+00 : f32
    %2 = vector.broadcast %cst : f32 to vector<16x16x4xf32>
    %c0_2 = arith.constant 0 : index
    %c0_3 = arith.constant 0 : index
    %c0_4 = arith.constant 0 : index
    %c0_5 = arith.constant 0 : index
    %3 = vector.load %arg1[%c0_2, %c0_3, %c0_4, %c0_5] : memref<1x18x18x4xf32, #tpu.memory_space<vmem>>, vector<1x16x16x4xf32>
    %4 = vector.shape_cast %3 : vector<1x16x16x4xf32> to vector<16x16x4xf32>
    %5 = vector.extract_strided_slice %1 {offsets = [0, 0], sizes = [1, 4], strides = [1, 1]} : vector<9x4xf32> to vector<1x4xf32>
    %6 = vector.shape_cast %5 : vector<1x4xf32> to vector<1x1x4xf32>
    %7 = vector.broadcast %6 : vector<1x1x4xf32> to vector<16x16x4xf32>
    %8 = arith.mulf %4, %7 : vector<16x16x4xf32>
    %9 = arith.addf %2, %8 : vector<16x16x4xf32>
    %c0_6 = arith.constant 0 : index
    %c0_7 = arith.constant 0 : index
    %c1 = arith.constant 1 : index
    %c0_8 = arith.constant 0 : index
    %10 = vector.load %arg1[%c0_6, %c0_7, %c1, %c0_8] : memref<1x18x18x4xf32, #tpu.memory_space<vmem>>, vector<1x16x16x4xf32>
    %11 = vector.shape_cast %10 : vector<1x16x16x4xf32> to vector<16x16x4xf32>
    %12 = vector.extract_strided_slice %1 {offsets = [1, 0], sizes = [1, 4], strides = [1, 1]} : vector<9x4xf32> to vector<1x4xf32>
    %13 = vector.shape_cast %12 : vector<1x4xf32> to vector<1x1x4xf32>
    %14 = vector.broadcast %13 : vector<1x1x4xf32> to vector<16x16x4xf32>
    %15 = arith.mulf %11, %14 : vector<16x16x4xf32>
    %16 = arith.addf %9, %15 : vector<16x16x4xf32>
    %c0_9 = arith.constant 0 : index
    %c0_10 = arith.constant 0 : index
    %c2 = arith.constant 2 : index
    %c0_11 = arith.constant 0 : index
    %17 = vector.load %arg1[%c0_9, %c0_10, %c2, %c0_11] : memref<1x18x18x4xf32, #tpu.memory_space<vmem>>, vector<1x16x16x4xf32>
    %18 = vector.shape_cast %17 : vector<1x16x16x4xf32> to vector<16x16x4xf32>
    %19 = vector.extract_strided_slice %1 {offsets = [2, 0], sizes = [1, 4], strides = [1, 1]} : vector<9x4xf32> to vector<1x4xf32>
    %20 = vector.shape_cast %19 : vector<1x4xf32> to vector<1x1x4xf32>
    %21 = vector.broadcast %20 : vector<1x1x4xf32> to vector<16x16x4xf32>
    %22 = arith.mulf %18, %21 : vector<16x16x4xf32>
    %23 = arith.addf %16, %22 : vector<16x16x4xf32>
    %c0_12 = arith.constant 0 : index
    %c1_13 = arith.constant 1 : index
    %c0_14 = arith.constant 0 : index
    %c0_15 = arith.constant 0 : index
    %24 = vector.load %arg1[%c0_12, %c1_13, %c0_14, %c0_15] : memref<1x18x18x4xf32, #tpu.memory_space<vmem>>, vector<1x16x16x4xf32>
    %25 = vector.shape_cast %24 : vector<1x16x16x4xf32> to vector<16x16x4xf32>
    %26 = vector.extract_strided_slice %1 {offsets = [3, 0], sizes = [1, 4], strides = [1, 1]} : vector<9x4xf32> to vector<1x4xf32>
    %27 = vector.shape_cast %26 : vector<1x4xf32> to vector<1x1x4xf32>
    %28 = vector.broadcast %27 : vector<1x1x4xf32> to vector<16x16x4xf32>
    %29 = arith.mulf %25, %28 : vector<16x16x4xf32>
    %30 = arith.addf %23, %29 : vector<16x16x4xf32>
    %c0_16 = arith.constant 0 : index
    %c1_17 = arith.constant 1 : index
    %c1_18 = arith.constant 1 : index
    %c0_19 = arith.constant 0 : index
    %31 = vector.load %arg1[%c0_16, %c1_17, %c1_18, %c0_19] : memref<1x18x18x4xf32, #tpu.memory_space<vmem>>, vector<1x16x16x4xf32>
    %32 = vector.shape_cast %31 : vector<1x16x16x4xf32> to vector<16x16x4xf32>
    %33 = vector.extract_strided_slice %1 {offsets = [4, 0], sizes = [1, 4], strides = [1, 1]} : vector<9x4xf32> to vector<1x4xf32>
    %34 = vector.shape_cast %33 : vector<1x4xf32> to vector<1x1x4xf32>
    %35 = vector.broadcast %34 : vector<1x1x4xf32> to vector<16x16x4xf32>
    %36 = arith.mulf %32, %35 : vector<16x16x4xf32>
    %37 = arith.addf %30, %36 : vector<16x16x4xf32>
    %c0_20 = arith.constant 0 : index
    %c1_21 = arith.constant 1 : index
    %c2_22 = arith.constant 2 : index
    %c0_23 = arith.constant 0 : index
    %38 = vector.load %arg1[%c0_20, %c1_21, %c2_22, %c0_23] : memref<1x18x18x4xf32, #tpu.memory_space<vmem>>, vector<1x16x16x4xf32>
    %39 = vector.shape_cast %38 : vector<1x16x16x4xf32> to vector<16x16x4xf32>
    %40 = vector.extract_strided_slice %1 {offsets = [5, 0], sizes = [1, 4], strides = [1, 1]} : vector<9x4xf32> to vector<1x4xf32>
    %41 = vector.shape_cast %40 : vector<1x4xf32> to vector<1x1x4xf32>
    %42 = vector.broadcast %41 : vector<1x1x4xf32> to vector<16x16x4xf32>
    %43 = arith.mulf %39, %42 : vector<16x16x4xf32>
    %44 = arith.addf %37, %43 : vector<16x16x4xf32>
    %c0_24 = arith.constant 0 : index
    %c2_25 = arith.constant 2 : index
    %c0_26 = arith.constant 0 : index
    %c0_27 = arith.constant 0 : index
    %45 = vector.load %arg1[%c0_24, %c2_25, %c0_26, %c0_27] : memref<1x18x18x4xf32, #tpu.memory_space<vmem>>, vector<1x16x16x4xf32>
    %46 = vector.shape_cast %45 : vector<1x16x16x4xf32> to vector<16x16x4xf32>
    %47 = vector.extract_strided_slice %1 {offsets = [6, 0], sizes = [1, 4], strides = [1, 1]} : vector<9x4xf32> to vector<1x4xf32>
    %48 = vector.shape_cast %47 : vector<1x4xf32> to vector<1x1x4xf32>
    %49 = vector.broadcast %48 : vector<1x1x4xf32> to vector<16x16x4xf32>
    %50 = arith.mulf %46, %49 : vector<16x16x4xf32>
    %51 = arith.addf %44, %50 : vector<16x16x4xf32>
    %c0_28 = arith.constant 0 : index
    %c2_29 = arith.constant 2 : index
    %c1_30 = arith.constant 1 : index
    %c0_31 = arith.constant 0 : index
    %52 = vector.load %arg1[%c0_28, %c2_29, %c1_30, %c0_31] : memref<1x18x18x4xf32, #tpu.memory_space<vmem>>, vector<1x16x16x4xf32>
    %53 = vector.shape_cast %52 : vector<1x16x16x4xf32> to vector<16x16x4xf32>
    %54 = vector.extract_strided_slice %1 {offsets = [7, 0], sizes = [1, 4], strides = [1, 1]} : vector<9x4xf32> to vector<1x4xf32>
    %55 = vector.shape_cast %54 : vector<1x4xf32> to vector<1x1x4xf32>
    %56 = vector.broadcast %55 : vector<1x1x4xf32> to vector<16x16x4xf32>
    %57 = arith.mulf %53, %56 : vector<16x16x4xf32>
    %58 = arith.addf %51, %57 : vector<16x16x4xf32>
    %c0_32 = arith.constant 0 : index
    %c2_33 = arith.constant 2 : index
    %c2_34 = arith.constant 2 : index
    %c0_35 = arith.constant 0 : index
    %59 = vector.load %arg1[%c0_32, %c2_33, %c2_34, %c0_35] : memref<1x18x18x4xf32, #tpu.memory_space<vmem>>, vector<1x16x16x4xf32>
    %60 = vector.shape_cast %59 : vector<1x16x16x4xf32> to vector<16x16x4xf32>
    %61 = vector.extract_strided_slice %1 {offsets = [8, 0], sizes = [1, 4], strides = [1, 1]} : vector<9x4xf32> to vector<1x4xf32>
    %62 = vector.shape_cast %61 : vector<1x4xf32> to vector<1x1x4xf32>
    %63 = vector.broadcast %62 : vector<1x1x4xf32> to vector<16x16x4xf32>
    %64 = arith.mulf %60, %63 : vector<16x16x4xf32>
    %65 = arith.addf %58, %64 : vector<16x16x4xf32>
    %66 = vector.shape_cast %65 : vector<16x16x4xf32> to vector<256x4xf32>
    %c0_36 = arith.constant 0 : index
    %c0_37 = arith.constant 0 : index
    %67 = vector.load %arg3[%c0_36, %c0_37] : memref<4x8xf32, #tpu.memory_space<vmem>>, vector<4x8xf32>
    %cst_38 = arith.constant dense<0.000000e+00> : vector<256x8xf32>
    %68 = tpu.matmul %66, %67, %cst_38 {dimension_numbers = #tpu.dot_dimension_numbers<[1], [0], [0], [1], [0, 0, 1, 1], [], []>} : vector<256x4xf32>, vector<4x8xf32>, vector<256x8xf32> -> vector<256x8xf32>
    %c0_39 = arith.constant 0 : index
    %c0_40 = arith.constant 0 : index
    %c0_41 = arith.constant 0 : index
    %69 = vector.load %arg4[%c0_39, %c0_40, %c0_41] : memref<1x256x1xf32, #tpu.memory_space<vmem>>, vector<1x256x1xf32>
    %70 = vector.shape_cast %69 : vector<1x256x1xf32> to vector<256x1xf32>
    %71 = vector.broadcast %70 : vector<256x1xf32> to vector<256x8xf32>
    %72 = arith.addf %68, %71 : vector<256x8xf32>
    %c0_42 = arith.constant 0 : index
    %c0_43 = arith.constant 0 : index
    %73 = vector.load %arg5[%c0_42, %c0_43] : memref<1x8xf32, #tpu.memory_space<vmem>>, vector<1x8xf32>
    %74 = vector.broadcast %73 : vector<1x8xf32> to vector<256x8xf32>
    %75 = arith.addf %72, %74 : vector<256x8xf32>
    %cst_44 = arith.constant 0.000000e+00 : f32
    %76 = vector.broadcast %cst_44 : f32 to vector<256x8xf32>
    %77 = arith.cmpf oge, %75, %76 : vector<256x8xf32>
    %cst_45 = arith.constant 2.000000e-01 : f32
    %78 = vector.broadcast %cst_45 : f32 to vector<256x8xf32>
    %79 = arith.mulf %78, %75 : vector<256x8xf32>
    %80 = arith.select %77, %75, %79 : vector<256x8xi1>, vector<256x8xf32>
    %c0_46 = arith.constant 0 : index
    %c0_47 = arith.constant 0 : index
    %c0_48 = arith.constant 0 : index
    %81 = vector.load %arg6[%c0_46, %c0_47, %c0_48] : memref<1x256x8xf32, #tpu.memory_space<vmem>>, vector<1x256x8xf32>
    %82 = vector.shape_cast %81 : vector<1x256x8xf32> to vector<256x8xf32>
    %83 = vector.shape_cast %80 : vector<256x8xf32> to vector<1x256x8xf32>
    tpu.vector_store %arg6[%c0_46, %c0_47, %c0_48], %83 {strides = array<i32>} : memref<1x256x8xf32, #tpu.memory_space<vmem>>, vector<1x256x8xf32>,
    return
  }
  func.func @transform_0(%arg0: i32) -> (i32, i32, i32, i32) {
    %c0_i32 = arith.constant 0 : i32
    %c0_i32_0 = arith.constant 0 : i32
    %c0_i32_1 = arith.constant 0 : i32
    %c0_i32_2 = arith.constant 0 : i32
    return %arg0, %c0_i32, %c0_i32_0, %c0_i32_1 : i32, i32, i32, i32
  }
  func.func @transform_1(%arg0: i32) -> (i32, i32, i32) {
    %c0_i32 = arith.constant 0 : i32
    %c0_i32_0 = arith.constant 0 : i32
    %c0_i32_1 = arith.constant 0 : i32
    return %arg0, %c0_i32, %c0_i32_0 : i32, i32, i32
  }
  func.func @transform_2(%arg0: i32) -> (i32, i32) {
    %c0_i32 = arith.constant 0 : i32
    %c0_i32_0 = arith.constant 0 : i32
    %c0_i32_1 = arith.constant 0 : i32
    return %c0_i32, %c0_i32_0 : i32, i32
  }
  func.func @transform_3(%arg0: i32) -> (i32, i32, i32) {
    %c0_i32 = arith.constant 0 : i32
    %c0_i32_0 = arith.constant 0 : i32
    %c0_i32_1 = arith.constant 0 : i32
    return %arg0, %c0_i32, %c0_i32_0 : i32, i32, i32
  }
  func.func @transform_4(%arg0: i32) -> (i32, i32) {
    %c0_i32 = arith.constant 0 : i32
    %c0_i32_0 = arith.constant 0 : i32
    %c0_i32_1 = arith.constant 0 : i32
    return %c0_i32, %c0_i32_0 : i32, i32
  }
  func.func @transform_5(%arg0: i32) -> (i32, i32, i32) {
    %c0_i32 = arith.constant 0 : i32
    %c0_i32_0 = arith.constant 0 : i32
    %c0_i32_1 = arith.constant 0 : i32
    return %arg0, %c0_i32, %c0_i32_0 : i32, i32, i32
  }
}

</mosaic_0001>

<llo_original>
// kernel: tpu_custom_call.1
$region0: #{tpu_custom_call.1}
  #allocation0 [shape = 'u32[]', space=smem, size = 0x4, offset = 0x4, fixed_abs, tag = 'smem constant byte address 0x4 - core index']
  #allocation1 [shape = 'u32[72,128]{1,0:T(1,128)}', space=vmem, size = 0x9000, scoped, tag = 'internal scratch']
  %s0 = inlined_call_operand.vmem [shape: f32[2,18,18,4], index: 0, kind: input, shape index: {}]
  %s1 = inlined_call_operand.vmem [shape: f32[2,9,4], index: 1, kind: input, shape index: {}]
  %s2 = inlined_call_operand.vmem [shape: f32[4,8], index: 2, kind: input, shape index: {}]
  %s3 = inlined_call_operand.vmem [shape: f32[2,256,1], index: 3, kind: input, shape index: {}]
  %s4 = inlined_call_operand.vmem [shape: f32[1,8], index: 4, kind: input, shape index: {}]
  %s5 = inlined_call_operand.vmem [shape: f32[2,256,8], index: 5, kind: output, shape index: {}]
  %s6 = sld [smem:[#allocation0]]
  $region53: #{tpu_custom_call.1} parent=0
    _
  %s8 = ssub.s32 1, %s6
  %s9 = scalar_select 0, %s8, %s6
  loop: start=0, step=1, limit=4
  $region2: #{tpu_custom_call.1} parent=0 // loop_pre_header
    _
  $region3: #{tpu_custom_call.1} parent=0 // loop_header
    %s11 = sphi 0, %s15
    %p12 = scmp.ge.s32.totalorder %s11, 4
    %s21 = sphi 0, %s23
    %s24 = sphi 0, %s21
    %s25 = sphi 0, %s24
    %s41 = sphi 0, %s25
    %s47 = sphi 0, %s49
    %s50 = sphi 0, %s47
    %s51 = sphi 0, %s50
    %s67 = sphi 0, %s51
    %s71 = sphi 0, %s71
    %s73 = sphi 0, %s71
    %s74 = sphi 0, %s73
    %s88 = sphi 0, %s74
    %s94 = sphi 0, %s96
    %s97 = sphi 0, %s94
    %s98 = sphi 0, %s97
    %s114 = sphi 0, %s98
    %s118 = sphi 0, %s118
    %s120 = sphi 0, %s118
    %s121 = sphi 0, %s120
    %s135 = sphi 0, %s121
    %s141 = sphi 0, %s143
    %s144 = sphi 0, %s141
    %s145 = sphi 0, %s144
    %s161 = sphi 0, %s145
  $region4: #{tpu_custom_call.1} parent=0 // loop_header_branch
    %14 = sbr.rel (%p12) target = $region8
  $region5: #{tpu_custom_call.1} parent=0 // loop_body
    %s16 = ssub.s32 %s11, 1
    %s17 = ssub.s32 %s11, 2
    %s18 = sadd.s32 %s11, 1
    %s19 = ssub.s32 %s11, %s18
    %p20 = scmp.eq.s32.totalorder %s19, 0
    %s22 = sadd.s32 %s21, 1
    %s23 = scalar_select %p20, %s21, %s22
    %p26 = pneg %p20
    %p27 = scmp.eq.s32.totalorder %s11, 1
    %p28 = por %p26, %p27
    %p29 = scmp.ne.s32.totalorder %s21, %s24
    %p30 = scmp.eq.s32.totalorder %s11, 0
    %p31 = por %p29, %p30
    %p32 = scmp.ne.s32.totalorder %s21, %s24
    %p33 = scmp.eq.s32.totalorder %s16, 1
    %p34 = por %p32, %p33
    %p35 = scmp.ne.s32.totalorder %s24, %s25
    %p36 = scmp.eq.s32.totalorder %s16, 0
    %p37 = por %p35, %p36
    %p38 = scmp.ne.s32.totalorder %s24, %s25
    %p39 = scmp.eq.s32.totalorder %s17, 1
    %p40 = por %p38, %p39
    %p42 = scmp.ne.s32.totalorder %s25, %s41
    %p43 = scmp.eq.s32.totalorder %s17, 0
    %p44 = por %p42, %p43
    %s45 = ssub.s32 %s11, %s18
    %p46 = scmp.eq.s32.totalorder %s45, 0
    %s48 = sadd.s32 %s47, 1
    %s49 = scalar_select %p46, %s47, %s48
    %p52 = pneg %p46
    %p53 = scmp.eq.s32.totalorder %s11, 1
    %p54 = por %p52, %p53
    %p55 = scmp.ne.s32.totalorder %s47, %s50
    %p56 = scmp.eq.s32.totalorder %s11, 0
    %p57 = por %p55, %p56
    %p58 = scmp.ne.s32.totalorder %s47, %s50
    %p59 = scmp.eq.s32.totalorder %s16, 1
    %p60 = por %p58, %p59
    %p61 = scmp.ne.s32.totalorder %s50, %s51
    %p62 = scmp.eq.s32.totalorder %s16, 0
    %p63 = por %p61, %p62
    %p64 = scmp.ne.s32.totalorder %s50, %s51
    %p65 = scmp.eq.s32.totalorder %s17, 1
    %p66 = por %p64, %p65
    %p68 = scmp.ne.s32.totalorder %s51, %s67
    %p69 = scmp.eq.s32.totalorder %s17, 0
    %p70 = por %p68, %p69
    %s72 = sadd.s32 %s71, 1
    %p75 = scmp.eq.s32.totalorder %s11, 1
    %p76 = scmp.ne.s32.totalorder %s71, %s73
    %p77 = scmp.eq.s32.totalorder %s11, 0
    %p78 = por %p76, %p77
    %p79 = scmp.ne.s32.totalorder %s71, %s73
    %p80 = scmp.eq.s32.totalorder %s16, 1
    %p81 = por %p79, %p80
    %p82 = scmp.ne.s32.totalorder %s73, %s74
    %p83 = scmp.eq.s32.totalorder %s16, 0
    %p84 = por %p82, %p83
    %p85 = scmp.ne.s32.totalorder %s73, %s74
    %p86 = scmp.eq.s32.totalorder %s17, 1
    %p87 = por %p85, %p86
    %p89 = scmp.ne.s32.totalorder %s74, %s88
    %p90 = scmp.eq.s32.totalorder %s17, 0
    %p91 = por %p89, %p90
    %s92 = ssub.s32 %s11, %s18
    %p93 = scmp.eq.s32.totalorder %s92, 0
    %s95 = sadd.s32 %s94, 1
    %s96 = scalar_select %p93, %s94, %s95
    %p99 = pneg %p93
    %p100 = scmp.eq.s32.totalorder %s11, 1
    %p101 = por %p99, %p100
    %p102 = scmp.ne.s32.totalorder %s94, %s97
    %p103 = scmp.eq.s32.totalorder %s11, 0
    %p104 = por %p102, %p103
    %p105 = scmp.ne.s32.totalorder %s94, %s97
    %p106 = scmp.eq.s32.totalorder %s16, 1
    %p107 = por %p105, %p106
    %p108 = scmp.ne.s32.totalorder %s97, %s98
    %p109 = scmp.eq.s32.totalorder %s16, 0
    %p110 = por %p108, %p109
    %p111 = scmp.ne.s32.totalorder %s97, %s98
    %p112 = scmp.eq.s32.totalorder %s17, 1
    %p113 = por %p111, %p112
    %p115 = scmp.ne.s32.totalorder %s98, %s114
    %p116 = scmp.eq.s32.totalorder %s17, 0
    %p117 = por %p115, %p116
    %s119 = sadd.s32 %s118, 1
    %p122 = scmp.eq.s32.totalorder %s11, 1
    %p123 = scmp.ne.s32.totalorder %s118, %s120
    %p124 = scmp.eq.s32.totalorder %s11, 0
    %p125 = por %p123, %p124
    %p126 = scmp.ne.s32.totalorder %s118, %s120
    %p127 = scmp.eq.s32.totalorder %s16, 1
    %p128 = por %p126, %p127
    %p129 = scmp.ne.s32.totalorder %s120, %s121
    %p130 = scmp.eq.s32.totalorder %s16, 0
    %p131 = por %p129, %p130
    %p132 = scmp.ne.s32.totalorder %s120, %s121
    %p133 = scmp.eq.s32.totalorder %s17, 1
    %p134 = por %p132, %p133
    %p136 = scmp.ne.s32.totalorder %s121, %s135
    %p137 = scmp.eq.s32.totalorder %s17, 0
    %p138 = por %p136, %p137
    %s139 = ssub.s32 %s11, %s18
    %p140 = scmp.eq.s32.totalorder %s139, 0
    %s142 = sadd.s32 %s141, 1
    %s143 = scalar_select %p140, %s141, %s142
    %p146 = pneg %p140
    %p147 = scmp.eq.s32.totalorder %s11, 1
    %p148 = por %p146, %p147
    %p149 = scmp.ne.s32.totalorder %s141, %s144
    %p150 = scmp.eq.s32.totalorder %s11, 0
    %p151 = por %p149, %p150
    %p152 = scmp.ne.s32.totalorder %s141, %s144
    %p153 = scmp.eq.s32.totalorder %s16, 1
    %p154 = por %p152, %p153
    %p155 = scmp.ne.s32.totalorder %s144, %s145
    %p156 = scmp.eq.s32.totalorder %s16, 0
    %p157 = por %p155, %p156
    %p158 = scmp.ne.s32.totalorder %s144, %s145
    %p159 = scmp.eq.s32.totalorder %s17, 1
    %p160 = por %p158, %p159
    %p162 = scmp.ne.s32.totalorder %s145, %s161
    %p163 = scmp.eq.s32.totalorder %s17, 0
    %p164 = por %p162, %p163
    %p165 = scmp.le.s32.totalorder 1, %s11
    %p166 = scmp.lt.s32.totalorder %s11, 3
    %p167 = pnand %p165, %p166
    %p168 = pneg %p167
    // Predicated region
    $region9: #{tpu_custom_call.1} parent=5 // pred_check
      _
    $region10: #{tpu_custom_call.1} parent=5 // pred_check_branch
      %170 = sbr.rel (%p167) target = $region12
    $region11: #{tpu_custom_call.1} parent=5 // pred_region
      %s171 = ssub.s32 %s11, 1
      // Predicated region
      $region13: #{tpu_custom_call.1} parent=11 // pred_check
        %p172 = pneg %p84
      $region14: #{tpu_custom_call.1} parent=11 // pred_check_branch
        %174 = sbr.rel (%p172) target = $region16
      $region15: #{tpu_custom_call.1} parent=11 // pred_region
        _
      $region16: #{tpu_custom_call.1} parent=11 // pred_fallthru
        _
      // Predicated region
      $region17: #{tpu_custom_call.1} parent=11 // pred_check
        %p175 = pneg %p131
      $region18: #{tpu_custom_call.1} parent=11 // pred_check_branch
        %177 = sbr.rel (%p175) target = $region20
      $region19: #{tpu_custom_call.1} parent=11 // pred_region
        _
      $region20: #{tpu_custom_call.1} parent=11 // pred_fallthru
        _
    $region12: #{tpu_custom_call.1} parent=5 // pred_fallthru
      _
    %p178 = scmp.lt.s32.totalorder %s11, 2
    // Predicated region
    $region21: #{tpu_custom_call.1} parent=5 // pred_check
      %p179 = pneg %p178
    $region22: #{tpu_custom_call.1} parent=5 // pred_check_branch
      %181 = sbr.rel (%p179) target = $region24
    $region23: #{tpu_custom_call.1} parent=5 // pred_region
      // Predicated region
      $region25: #{tpu_custom_call.1} parent=23 // pred_check
        %p182 = pneg %p31
      $region26: #{tpu_custom_call.1} parent=23 // pred_check_branch
        %184 = sbr.rel (%p182) target = $region28
      $region27: #{tpu_custom_call.1} parent=23 // pred_region
        %p185 = scmp.lt.s32.totalorder %s11, 1
        %s186 = scalar_select %p185, %s11, 1
        %s187 = smul.addr %s186, 54
        %s188 = smul.addr %s187, 8
        %s189 = scalar_lea.vmem %s0, %s188
      $region28: #{tpu_custom_call.1} parent=23 // pred_fallthru
        _
      // Predicated region
      $region29: #{tpu_custom_call.1} parent=23 // pred_check
        %p190 = pneg %p57
      $region30: #{tpu_custom_call.1} parent=23 // pred_check_branch
        %192 = sbr.rel (%p190) target = $region32
      $region31: #{tpu_custom_call.1} parent=23 // pred_region
        %p193 = scmp.lt.s32.totalorder %s11, 1
        %s194 = scalar_select %p193, %s11, 1
        %s195 = smul.addr %s194, 2
        %s196 = smul.addr %s195, 8
        %s197 = scalar_lea.vmem %s1, %s196
      $region32: #{tpu_custom_call.1} parent=23 // pred_fallthru
        _
      // Predicated region
      $region33: #{tpu_custom_call.1} parent=23 // pred_check
        %p198 = pneg %p104
      $region34: #{tpu_custom_call.1} parent=23 // pred_check_branch
        %200 = sbr.rel (%p198) target = $region36
      $region35: #{tpu_custom_call.1} parent=23 // pred_region
        %p201 = scmp.lt.s32.totalorder %s11, 1
        %s202 = scalar_select %p201, %s11, 1
        %s203 = smul.addr %s202, 32
        %s204 = smul.addr %s203, 8
        %s205 = scalar_lea.vmem %s3, %s204
      $region36: #{tpu_custom_call.1} parent=23 // pred_fallthru
        _
    $region24: #{tpu_custom_call.1} parent=5 // pred_fallthru
      _
    %p206 = scmp.le.s32.totalorder 1, %s11
    %p207 = scmp.lt.s32.totalorder %s11, 3
    %p208 = pnand %p206, %p207
    %p209 = pneg %p208
    // Predicated region
    $region37: #{tpu_custom_call.1} parent=5 // pred_check
      _
    $region38: #{tpu_custom_call.1} parent=5 // pred_check_branch
      %211 = sbr.rel (%p208) target = $region40
    $region39: #{tpu_custom_call.1} parent=5 // pred_region
      %s212 = ssub.s32 %s11, 1
      %p213 = scmp.lt.s32.totalorder %s16, 1
      %s214 = scalar_select %p213, %s16, 1
      %s215 = smul.addr %s214, 54
      %s216 = smul.addr %s215, 8
      %s217 = scalar_lea.vmem %s0, %s216
      %p218 = pneg %p37
      %p219 = pneg %p34
      %p220 = scmp.lt.s32.totalorder %s16, 1
      %s221 = scalar_select %p220, %s16, 1
      %s222 = smul.addr %s221, 2
      %s223 = smul.addr %s222, 8
      %s224 = scalar_lea.vmem %s1, %s223
      %p225 = pneg %p63
      %p226 = pneg %p60
      %p227 = pneg %p84
      %p228 = pneg %p81
      %p229 = scmp.lt.s32.totalorder %s16, 1
      %s230 = scalar_select %p229, %s16, 1
      %s231 = smul.addr %s230, 32
      %s232 = smul.addr %s231, 8
      %s233 = scalar_lea.vmem %s3, %s232
      %p234 = pneg %p110
      %p235 = pneg %p107
      %p236 = pneg %p131
      %p237 = pneg %p128
      %p238 = pneg %p157
      %p239 = pneg %p154
      %p240 = scmp.lt.s32.totalorder %s16, 1
      %s241 = scalar_select %p240, %s16, 1
      %s242 = smul.addr %s241, 32
      %s243 = smul.addr %s242, 8
      %s244 = scalar_lea.vmem %s5, %s243
      %p245 = scmp.lt.s32.totalorder %s16, 1
      %s246 = scalar_select %p245, %s16, 1
      %s247 = smul.addr %s246, 54
      %s248 = smul.addr %s247, 8
      %s249 = scalar_lea.vmem %s0, %s248
      %p250 = scmp.lt.s32.totalorder %s16, 1
      %s251 = scalar_select %p250, %s16, 1
      %s252 = smul.addr %s251, 2
      %s253 = smul.addr %s252, 8
      %s254 = scalar_lea.vmem %s1, %s253
      %p255 = scmp.lt.s32.totalorder %s16, 1
      %s256 = scalar_select %p255, %s16, 1
      %s257 = smul.addr %s256, 32
      %s258 = smul.addr %s257, 8
      %s259 = scalar_lea.vmem %s3, %s258
      %p260 = scmp.lt.s32.totalorder %s16, 1
      %s261 = scalar_select %p260, %s16, 1
      %s262 = smul.addr %s261, 32
      %s263 = smul.addr %s262, 8
      %s264 = scalar_lea.vmem %s5, %s263
      %v265 = vld [vmem:[%s254] sm:$0xff]
      %v266 = vld [vmem:[%s254 + $0x8] sm:$0x1]
      %v267 = vld [vmem:[%s249] sm:$0xff]
      %v268 = vld [vmem:[%s249 + $0x8] sm:$0xff]
      %v269 = vld [vmem:[%s249 + $0x18] sm:$0xff]
      %v270 = vld [vmem:[%s249 + $0x20] sm:$0xff]
      %v271 = vld [vmem:[%s249 + $0x30] sm:$0xff]
      %v272 = vld [vmem:[%s249 + $0x38] sm:$0xff]
      %v273 = vld [vmem:[%s249 + $0x48] sm:$0xff]
      %v274 = vld [vmem:[%s249 + $0x50] sm:$0xff]
      %v275 = vld [vmem:[%s249 + $0x60] sm:$0xff]
      %v276 = vld [vmem:[%s249 + $0x68] sm:$0xff]
      %v277 = vld [vmem:[%s249 + $0x78] sm:$0xff]
      %v278 = vld [vmem:[%s249 + $0x80] sm:$0xff]
      %v279 = vld [vmem:[%s249 + $0x90] sm:$0xff]
      %v280 = vld [vmem:[%s249 + $0x98] sm:$0xff]
      %v281 = vld [vmem:[%s249 + $0xa8] sm:$0xff]
      %v282 = vld [vmem:[%s249 + $0xb0] sm:$0xff]
      %v283 = vld [vmem:[%s249 + $0xc0] sm:$0xff]
      %v284 = vld [vmem:[%s249 + $0xc8] sm:$0xff]
      %v285 = vld [vmem:[%s249 + $0xd8] sm:$0xff]
      %v286 = vld [vmem:[%s249 + $0xe0] sm:$0xff]
      %v287 = vld [vmem:[%s249 + $0xf0] sm:$0xff]
      %v288 = vld [vmem:[%s249 + $0xf8] sm:$0xff]
      %v289 = vld [vmem:[%s249 + $0x108] sm:$0xff]
      %v290 = vld [vmem:[%s249 + $0x110] sm:$0xff]
      %v291 = vld [vmem:[%s249 + $0x120] sm:$0xff]
      %v292 = vld [vmem:[%s249 + $0x128] sm:$0xff]
      %v293 = vld [vmem:[%s249 + $0x138] sm:$0xff]
      %v294 = vld [vmem:[%s249 + $0x140] sm:$0xff]
      %v295 = vld [vmem:[%s249 + $0x150] sm:$0xff]
      %v296 = vld [vmem:[%s249 + $0x158] sm:$0xff]
      %v297 = vld [vmem:[%s249 + $0x168] sm:$0xff]
      %v298 = vld [vmem:[%s249 + $0x170] sm:$0xff]
      %v299 = vperm.slane %v265, 0
      %v300 = vmul.f32 %v267, %v299
      %v301 = vmul.f32 %v268, %v299
      %v302 = vmul.f32 %v269, %v299
      %v303 = vmul.f32 %v270, %v299
      %v304 = vmul.f32 %v271, %v299
      %v305 = vmul.f32 %v272, %v299
      %v306 = vmul.f32 %v273, %v299
      %v307 = vmul.f32 %v274, %v299
      %v308 = vmul.f32 %v275, %v299
      %v309 = vmul.f32 %v276, %v299
      %v310 = vmul.f32 %v277, %v299
      %v311 = vmul.f32 %v278, %v299
      %v312 = vmul.f32 %v279, %v299
      %v313 = vmul.f32 %v280, %v299
      %v314 = vmul.f32 %v281, %v299
      %v315 = vmul.f32 %v282, %v299
      %v316 = vmul.f32 %v283, %v299
      %v317 = vmul.f32 %v284, %v299
      %v318 = vmul.f32 %v285, %v299
      %v319 = vmul.f32 %v286, %v299
      %v320 = vmul.f32 %v287, %v299
      %v321 = vmul.f32 %v288, %v299
      %v322 = vmul.f32 %v289, %v299
      %v323 = vmul.f32 %v290, %v299
      %v324 = vmul.f32 %v291, %v299
      %v325 = vmul.f32 %v292, %v299
      %v326 = vmul.f32 %v293, %v299
      %v327 = vmul.f32 %v294, %v299
      %v328 = vmul.f32 %v295, %v299
      %v329 = vmul.f32 %v296, %v299
      %v330 = vmul.f32 %v297, %v299
      %v331 = vmul.f32 %v298, %v299
      %v332 = vadd.f32 %v300, 0.0
      %v333 = vadd.f32 %v301, 0.0
      %v334 = vadd.f32 %v302, 0.0
      %v335 = vadd.f32 %v303, 0.0
      %v336 = vadd.f32 %v304, 0.0
      %v337 = vadd.f32 %v305, 0.0
      %v338 = vadd.f32 %v306, 0.0
      %v339 = vadd.f32 %v307, 0.0
      %v340 = vadd.f32 %v308, 0.0
      %v341 = vadd.f32 %v309, 0.0
      %v342 = vadd.f32 %v310, 0.0
      %v343 = vadd.f32 %v311, 0.0
      %v344 = vadd.f32 %v312, 0.0
      %v345 = vadd.f32 %v313, 0.0
      %v346 = vadd.f32 %v314, 0.0
      %v347 = vadd.f32 %v315, 0.0
      %v348 = vadd.f32 %v316, 0.0
      %v349 = vadd.f32 %v317, 0.0
      %v350 = vadd.f32 %v318, 0.0
      %v351 = vadd.f32 %v319, 0.0
      %v352 = vadd.f32 %v320, 0.0
      %v353 = vadd.f32 %v321, 0.0
      %v354 = vadd.f32 %v322, 0.0
      %v355 = vadd.f32 %v323, 0.0
      %v356 = vadd.f32 %v324, 0.0
      %v357 = vadd.f32 %v325, 0.0
      %v358 = vadd.f32 %v326, 0.0
      %v359 = vadd.f32 %v327, 0.0
      %v360 = vadd.f32 %v328, 0.0
      %v361 = vadd.f32 %v329, 0.0
      %v362 = vadd.f32 %v330, 0.0
      %v363 = vadd.f32 %v331, 0.0
      %v364 = vld [vmem:[%s249 + $0x1] sm:$0xff]
      %v365 = vld [vmem:[%s249 + $0x9] sm:$0xff]
      %v366 = vld [vmem:[%s249 + $0x19] sm:$0xff]
      %v367 = vld [vmem:[%s249 + $0x21] sm:$0xff]
      %v368 = vld [vmem:[%s249 + $0x31] sm:$0xff]
      %v369 = vld [vmem:[%s249 + $0x39] sm:$0xff]
      %v370 = vld [vmem:[%s249 + $0x49] sm:$0xff]
      %v371 = vld [vmem:[%s249 + $0x51] sm:$0xff]
      %v372 = vld [vmem:[%s249 + $0x61] sm:$0xff]
      %v373 = vld [vmem:[%s249 + $0x69] sm:$0xff]
      %v374 = vld [vmem:[%s249 + $0x79] sm:$0xff]
      %v375 = vld [vmem:[%s249 + $0x81] sm:$0xff]
      %v376 = vld [vmem:[%s249 + $0x91] sm:$0xff]
      %v377 = vld [vmem:[%s249 + $0x99] sm:$0xff]
      %v378 = vld [vmem:[%s249 + $0xa9] sm:$0xff]
      %v379 = vld [vmem:[%s249 + $0xb1] sm:$0xff]
      %v380 = vld [vmem:[%s249 + $0xc1] sm:$0xff]
      %v381 = vld [vmem:[%s249 + $0xc9] sm:$0xff]
      %v382 = vld [vmem:[%s249 + $0xd9] sm:$0xff]
      %v383 = vld [vmem:[%s249 + $0xe1] sm:$0xff]
      %v384 = vld [vmem:[%s249 + $0xf1] sm:$0xff]
      %v385 = vld [vmem:[%s249 + $0xf9] sm:$0xff]
      %v386 = vld [vmem:[%s249 + $0x109] sm:$0xff]
      %v387 = vld [vmem:[%s249 + $0x111] sm:$0xff]
      %v388 = vld [vmem:[%s249 + $0x121] sm:$0xff]
      %v389 = vld [vmem:[%s249 + $0x129] sm:$0xff]
      %v390 = vld [vmem:[%s249 + $0x139] sm:$0xff]
      %v391 = vld [vmem:[%s249 + $0x141] sm:$0xff]
      %v392 = vld [vmem:[%s249 + $0x151] sm:$0xff]
      %v393 = vld [vmem:[%s249 + $0x159] sm:$0xff]
      %v394 = vld [vmem:[%s249 + $0x169] sm:$0xff]
      %v395 = vld [vmem:[%s249 + $0x171] sm:$0xff]
      %v396 = vperm.slane %v265, 1
      %v397 = vmul.f32 %v364, %v396
      %v398 = vmul.f32 %v365, %v396
      %v399 = vmul.f32 %v366, %v396
      %v400 = vmul.f32 %v367, %v396
      %v401 = vmul.f32 %v368, %v396
      %v402 = vmul.f32 %v369, %v396
      %v403 = vmul.f32 %v370, %v396
      %v404 = vmul.f32 %v371, %v396
      %v405 = vmul.f32 %v372, %v396
      %v406 = vmul.f32 %v373, %v396
      %v407 = vmul.f32 %v374, %v396
      %v408 = vmul.f32 %v375, %v396
      %v409 = vmul.f32 %v376, %v396
      %v410 = vmul.f32 %v377, %v396
      %v411 = vmul.f32 %v378, %v396
      %v412 = vmul.f32 %v379, %v396
      %v413 = vmul.f32 %v380, %v396
      %v414 = vmul.f32 %v381, %v396
      %v415 = vmul.f32 %v382, %v396
      %v416 = vmul.f32 %v383, %v396
      %v417 = vmul.f32 %v384, %v396
      %v418 = vmul.f32 %v385, %v396
      %v419 = vmul.f32 %v386, %v396
      %v420 = vmul.f32 %v387, %v396
      %v421 = vmul.f32 %v388, %v396
      %v422 = vmul.f32 %v389, %v396
      %v423 = vmul.f32 %v390, %v396
      %v424 = vmul.f32 %v391, %v396
      %v425 = vmul.f32 %v392, %v396
      %v426 = vmul.f32 %v393, %v396
      %v427 = vmul.f32 %v394, %v396
      %v428 = vmul.f32 %v395, %v396
      %v429 = vadd.f32 %v332, %v397
      %v430 = vadd.f32 %v333, %v398
      %v431 = vadd.f32 %v334, %v399
      %v432 = vadd.f32 %v335, %v400
      %v433 = vadd.f32 %v336, %v401
      %v434 = vadd.f32 %v337, %v402
      %v435 = vadd.f32 %v338, %v403
      %v436 = vadd.f32 %v339, %v404
      %v437 = vadd.f32 %v340, %v405
      %v438 = vadd.f32 %v341, %v406
      %v439 = vadd.f32 %v342, %v407
      %v440 = vadd.f32 %v343, %v408
      %v441 = vadd.f32 %v344, %v409
      %v442 = vadd.f32 %v345, %v410
      %v443 = vadd.f32 %v346, %v411
      %v444 = vadd.f32 %v347, %v412
      %v445 = vadd.f32 %v348, %v413
      %v446 = vadd.f32 %v349, %v414
      %v447 = vadd.f32 %v350, %v415
      %v448 = vadd.f32 %v351, %v416
      %v449 = vadd.f32 %v352, %v417
      %v450 = vadd.f32 %v353, %v418
      %v451 = vadd.f32 %v354, %v419
      %v452 = vadd.f32 %v355, %v420
      %v453 = vadd.f32 %v356, %v421
      %v454 = vadd.f32 %v357, %v422
      %v455 = vadd.f32 %v358, %v423
      %v456 = vadd.f32 %v359, %v424
      %v457 = vadd.f32 %v360, %v425
      %v458 = vadd.f32 %v361, %v426
      %v459 = vadd.f32 %v362, %v427
      %v460 = vadd.f32 %v363, %v428
      %v461 = vld [vmem:[%s249 + $0x2] sm:$0xff]
      %v462 = vld [vmem:[%s249 + $0xa] sm:$0xff]
      %v463 = vld [vmem:[%s249 + $0x1a] sm:$0xff]
      %v464 = vld [vmem:[%s249 + $0x22] sm:$0xff]
      %v465 = vld [vmem:[%s249 + $0x32] sm:$0xff]
      %v466 = vld [vmem:[%s249 + $0x3a] sm:$0xff]
      %v467 = vld [vmem:[%s249 + $0x4a] sm:$0xff]
      %v468 = vld [vmem:[%s249 + $0x52] sm:$0xff]
      %v469 = vld [vmem:[%s249 + $0x62] sm:$0xff]
      %v470 = vld [vmem:[%s249 + $0x6a] sm:$0xff]
      %v471 = vld [vmem:[%s249 + $0x7a] sm:$0xff]
      %v472 = vld [vmem:[%s249 + $0x82] sm:$0xff]
      %v473 = vld [vmem:[%s249 + $0x92] sm:$0xff]
      %v474 = vld [vmem:[%s249 + $0x9a] sm:$0xff]
      %v475 = vld [vmem:[%s249 + $0xaa] sm:$0xff]
      %v476 = vld [vmem:[%s249 + $0xb2] sm:$0xff]
      %v477 = vld [vmem:[%s249 + $0xc2] sm:$0xff]
      %v478 = vld [vmem:[%s249 + $0xca] sm:$0xff]
      %v479 = vld [vmem:[%s249 + $0xda] sm:$0xff]
      %v480 = vld [vmem:[%s249 + $0xe2] sm:$0xff]
      %v481 = vld [vmem:[%s249 + $0xf2] sm:$0xff]
      %v482 = vld [vmem:[%s249 + $0xfa] sm:$0xff]
      %v483 = vld [vmem:[%s249 + $0x10a] sm:$0xff]
      %v484 = vld [vmem:[%s249 + $0x112] sm:$0xff]
      %v485 = vld [vmem:[%s249 + $0x122] sm:$0xff]
      %v486 = vld [vmem:[%s249 + $0x12a] sm:$0xff]
      %v487 = vld [vmem:[%s249 + $0x13a] sm:$0xff]
      %v488 = vld [vmem:[%s249 + $0x142] sm:$0xff]
      %v489 = vld [vmem:[%s249 + $0x152] sm:$0xff]
      %v490 = vld [vmem:[%s249 + $0x15a] sm:$0xff]
      %v491 = vld [vmem:[%s249 + $0x16a] sm:$0xff]
      %v492 = vld [vmem:[%s249 + $0x172] sm:$0xff]
      %v493 = vperm.slane %v265, 2
      %v494 = vmul.f32 %v461, %v493
      %v495 = vmul.f32 %v462, %v493
      %v496 = vmul.f32 %v463, %v493
      %v497 = vmul.f32 %v464, %v493
      %v498 = vmul.f32 %v465, %v493
      %v499 = vmul.f32 %v466, %v493
      %v500 = vmul.f32 %v467, %v493
      %v501 = vmul.f32 %v468, %v493
      %v502 = vmul.f32 %v469, %v493
      %v503 = vmul.f32 %v470, %v493
      %v504 = vmul.f32 %v471, %v493
      %v505 = vmul.f32 %v472, %v493
      %v506 = vmul.f32 %v473, %v493
      %v507 = vmul.f32 %v474, %v493
      %v508 = vmul.f32 %v475, %v493
      %v509 = vmul.f32 %v476, %v493
      %v510 = vmul.f32 %v477, %v493
      %v511 = vmul.f32 %v478, %v493
      %v512 = vmul.f32 %v479, %v493
      %v513 = vmul.f32 %v480, %v493
      %v514 = vmul.f32 %v481, %v493
      %v515 = vmul.f32 %v482, %v493
      %v516 = vmul.f32 %v483, %v493
      %v517 = vmul.f32 %v484, %v493
      %v518 = vmul.f32 %v485, %v493
      %v519 = vmul.f32 %v486, %v493
      %v520 = vmul.f32 %v487, %v493
      %v521 = vmul.f32 %v488, %v493
      %v522 = vmul.f32 %v489, %v493
      %v523 = vmul.f32 %v490, %v493
      %v524 = vmul.f32 %v491, %v493
      %v525 = vmul.f32 %v492, %v493
      %v526 = vadd.f32 %v429, %v494
      %v527 = vadd.f32 %v430, %v495
      %v528 = vadd.f32 %v431, %v496
      %v529 = vadd.f32 %v432, %v497
      %v530 = vadd.f32 %v433, %v498
      %v531 = vadd.f32 %v434, %v499
      %v532 = vadd.f32 %v435, %v500
      %v533 = vadd.f32 %v436, %v501
      %v534 = vadd.f32 %v437, %v502
      %v535 = vadd.f32 %v438, %v503
      %v536 = vadd.f32 %v439, %v504
      %v537 = vadd.f32 %v440, %v505
      %v538 = vadd.f32 %v441, %v506
      %v539 = vadd.f32 %v442, %v507
      %v540 = vadd.f32 %v443, %v508
      %v541 = vadd.f32 %v444, %v509
      %v542 = vadd.f32 %v445, %v510
      %v543 = vadd.f32 %v446, %v511
      %v544 = vadd.f32 %v447, %v512
      %v545 = vadd.f32 %v448, %v513
      %v546 = vadd.f32 %v449, %v514
      %v547 = vadd.f32 %v450, %v515
      %v548 = vadd.f32 %v451, %v516
      %v549 = vadd.f32 %v452, %v517
      %v550 = vadd.f32 %v453, %v518
      %v551 = vadd.f32 %v454, %v519
      %v552 = vadd.f32 %v455, %v520
      %v553 = vadd.f32 %v456, %v521
      %v554 = vadd.f32 %v457, %v522
      %v555 = vadd.f32 %v458, %v523
      %v556 = vadd.f32 %v459, %v524
      %v557 = vadd.f32 %v460, %v525
      %s558 = scalar_lea.vmem %s249, 24
      %v559 = vld [vmem:[%s558] sm:$0xff]
      %v560 = vld [vmem:[%s558 + $0x8] sm:$0xff]
      %v561 = vld [vmem:[%s558 + $0x18] sm:$0xff]
      %v562 = vld [vmem:[%s558 + $0x20] sm:$0xff]
      %v563 = vld [vmem:[%s558 + $0x30] sm:$0xff]
      %v564 = vld [vmem:[%s558 + $0x38] sm:$0xff]
      %v565 = vld [vmem:[%s558 + $0x48] sm:$0xff]
      %v566 = vld [vmem:[%s558 + $0x50] sm:$0xff]
      %v567 = vld [vmem:[%s558 + $0x60] sm:$0xff]
      %v568 = vld [vmem:[%s558 + $0x68] sm:$0xff]
      %v569 = vld [vmem:[%s558 + $0x78] sm:$0xff]
      %v570 = vld [vmem:[%s558 + $0x80] sm:$0xff]
      %v571 = vld [vmem:[%s558 + $0x90] sm:$0xff]
      %v572 = vld [vmem:[%s558 + $0x98] sm:$0xff]
      %v573 = vld [vmem:[%s558 + $0xa8] sm:$0xff]
      %v574 = vld [vmem:[%s558 + $0xb0] sm:$0xff]
      %v575 = vld [vmem:[%s558 + $0xc0] sm:$0xff]
      %v576 = vld [vmem:[%s558 + $0xc8] sm:$0xff]
      %v577 = vld [vmem:[%s558 + $0xd8] sm:$0xff]
      %v578 = vld [vmem:[%s558 + $0xe0] sm:$0xff]
      %v579 = vld [vmem:[%s558 + $0xf0] sm:$0xff]
      %v580 = vld [vmem:[%s558 + $0xf8] sm:$0xff]
      %v581 = vld [vmem:[%s558 + $0x108] sm:$0xff]
      %v582 = vld [vmem:[%s558 + $0x110] sm:$0xff]
      %v583 = vld [vmem:[%s558 + $0x120] sm:$0xff]
      %v584 = vld [vmem:[%s558 + $0x128] sm:$0xff]
      %v585 = vld [vmem:[%s558 + $0x138] sm:$0xff]
      %v586 = vld [vmem:[%s558 + $0x140] sm:$0xff]
      %v587 = vld [vmem:[%s558 + $0x150] sm:$0xff]
      %v588 = vld [vmem:[%s558 + $0x158] sm:$0xff]
      %v589 = vld [vmem:[%s558 + $0x168] sm:$0xff]
      %v590 = vld [vmem:[%s558 + $0x170] sm:$0xff]
      %v591 = vperm.slane %v265, 3
      %v592 = vmul.f32 %v559, %v591
      %v593 = vmul.f32 %v560, %v591
      %v594 = vmul.f32 %v561, %v591
      %v595 = vmul.f32 %v562, %v591
      %v596 = vmul.f32 %v563, %v591
      %v597 = vmul.f32 %v564, %v591
      %v598 = vmul.f32 %v565, %v591
      %v599 = vmul.f32 %v566, %v591
      %v600 = vmul.f32 %v567, %v591
      %v601 = vmul.f32 %v568, %v591
      %v602 = vmul.f32 %v569, %v591
      %v603 = vmul.f32 %v570, %v591
      %v604 = vmul.f32 %v571, %v591
      %v605 = vmul.f32 %v572, %v591
      %v606 = vmul.f32 %v573, %v591
      %v607 = vmul.f32 %v574, %v591
      %v608 = vmul.f32 %v575, %v591
      %v609 = vmul.f32 %v576, %v591
      %v610 = vmul.f32 %v577, %v591
      %v611 = vmul.f32 %v578, %v591
      %v612 = vmul.f32 %v579, %v591
      %v613 = vmul.f32 %v580, %v591
      %v614 = vmul.f32 %v581, %v591
      %v615 = vmul.f32 %v582, %v591
      %v616 = vmul.f32 %v583, %v591
      %v617 = vmul.f32 %v584, %v591
      %v618 = vmul.f32 %v585, %v591
      %v619 = vmul.f32 %v586, %v591
      %v620 = vmul.f32 %v587, %v591
      %v621 = vmul.f32 %v588, %v591
      %v622 = vmul.f32 %v589, %v591
      %v623 = vmul.f32 %v590, %v591
      %v624 = vadd.f32 %v526, %v592
      %v625 = vadd.f32 %v527, %v593
      %v626 = vadd.f32 %v528, %v594
      %v627 = vadd.f32 %v529, %v595
      %v628 = vadd.f32 %v530, %v596
      %v629 = vadd.f32 %v531, %v597
      %v630 = vadd.f32 %v532, %v598
      %v631 = vadd.f32 %v533, %v599
      %v632 = vadd.f32 %v534, %v600
      %v633 = vadd.f32 %v535, %v601
      %v634 = vadd.f32 %v536, %v602
      %v635 = vadd.f32 %v537, %v603
      %v636 = vadd.f32 %v538, %v604
      %v637 = vadd.f32 %v539, %v605
      %v638 = vadd.f32 %v540, %v606
      %v639 = vadd.f32 %v541, %v607
      %v640 = vadd.f32 %v542, %v608
      %v641 = vadd.f32 %v543, %v609
      %v642 = vadd.f32 %v544, %v610
      %v643 = vadd.f32 %v545, %v611
      %v644 = vadd.f32 %v546, %v612
      %v645 = vadd.f32 %v547, %v613
      %v646 = vadd.f32 %v548, %v614
      %v647 = vadd.f32 %v549, %v615
      %v648 = vadd.f32 %v550, %v616
      %v649 = vadd.f32 %v551, %v617
      %v650 = vadd.f32 %v552, %v618
      %v651 = vadd.f32 %v553, %v619
      %v652 = vadd.f32 %v554, %v620
      %v653 = vadd.f32 %v555, %v621
      %v654 = vadd.f32 %v556, %v622
      %v655 = vadd.f32 %v557, %v623
      %v656 = vld [vmem:[%s558 + $0x1] sm:$0xff]
      %v657 = vld [vmem:[%s558 + $0x9] sm:$0xff]
      %v658 = vld [vmem:[%s558 + $0x19] sm:$0xff]
      %v659 = vld [vmem:[%s558 + $0x21] sm:$0xff]
      %v660 = vld [vmem:[%s558 + $0x31] sm:$0xff]
      %v661 = vld [vmem:[%s558 + $0x39] sm:$0xff]
      %v662 = vld [vmem:[%s558 + $0x49] sm:$0xff]
      %v663 = vld [vmem:[%s558 + $0x51] sm:$0xff]
      %v664 = vld [vmem:[%s558 + $0x61] sm:$0xff]
      %v665 = vld [vmem:[%s558 + $0x69] sm:$0xff]
      %v666 = vld [vmem:[%s558 + $0x79] sm:$0xff]
      %v667 = vld [vmem:[%s558 + $0x81] sm:$0xff]
      %v668 = vld [vmem:[%s558 + $0x91] sm:$0xff]
      %v669 = vld [vmem:[%s558 + $0x99] sm:$0xff]
      %v670 = vld [vmem:[%s558 + $0xa9] sm:$0xff]
      %v671 = vld [vmem:[%s558 + $0xb1] sm:$0xff]
      %v672 = vld [vmem:[%s558 + $0xc1] sm:$0xff]
      %v673 = vld [vmem:[%s558 + $0xc9] sm:$0xff]
      %v674 = vld [vmem:[%s558 + $0xd9] sm:$0xff]
      %v675 = vld [vmem:[%s558 + $0xe1] sm:$0xff]
      %v676 = vld [vmem:[%s558 + $0xf1] sm:$0xff]
      %v677 = vld [vmem:[%s558 + $0xf9] sm:$0xff]
      %v678 = vld [vmem:[%s558 + $0x109] sm:$0xff]
      %v679 = vld [vmem:[%s558 + $0x111] sm:$0xff]
      %v680 = vld [vmem:[%s558 + $0x121] sm:$0xff]
      %v681 = vld [vmem:[%s558 + $0x129] sm:$0xff]
      %v682 = vld [vmem:[%s558 + $0x139] sm:$0xff]
      %v683 = vld [vmem:[%s558 + $0x141] sm:$0xff]
      %v684 = vld [vmem:[%s558 + $0x151] sm:$0xff]
      %v685 = vld [vmem:[%s558 + $0x159] sm:$0xff]
      %v686 = vld [vmem:[%s558 + $0x169] sm:$0xff]
      %v687 = vld [vmem:[%s558 + $0x171] sm:$0xff]
      %v688 = vperm.slane %v265, 4
      %v689 = vmul.f32 %v656, %v688
      %v690 = vmul.f32 %v657, %v688
      %v691 = vmul.f32 %v658, %v688
      %v692 = vmul.f32 %v659, %v688
      %v693 = vmul.f32 %v660, %v688
      %v694 = vmul.f32 %v661, %v688
      %v695 = vmul.f32 %v662, %v688
      %v696 = vmul.f32 %v663, %v688
      %v697 = vmul.f32 %v664, %v688
      %v698 = vmul.f32 %v665, %v688
      %v699 = vmul.f32 %v666, %v688
      %v700 = vmul.f32 %v667, %v688
      %v701 = vmul.f32 %v668, %v688
      %v702 = vmul.f32 %v669, %v688
      %v703 = vmul.f32 %v670, %v688
      %v704 = vmul.f32 %v671, %v688
      %v705 = vmul.f32 %v672, %v688
      %v706 = vmul.f32 %v673, %v688
      %v707 = vmul.f32 %v674, %v688
      %v708 = vmul.f32 %v675, %v688
      %v709 = vmul.f32 %v676, %v688
      %v710 = vmul.f32 %v677, %v688
      %v711 = vmul.f32 %v678, %v688
      %v712 = vmul.f32 %v679, %v688
      %v713 = vmul.f32 %v680, %v688
      %v714 = vmul.f32 %v681, %v688
      %v715 = vmul.f32 %v682, %v688
      %v716 = vmul.f32 %v683, %v688
      %v717 = vmul.f32 %v684, %v688
      %v718 = vmul.f32 %v685, %v688
      %v719 = vmul.f32 %v686, %v688
      %v720 = vmul.f32 %v687, %v688
      %v721 = vadd.f32 %v624, %v689
      %v722 = vadd.f32 %v625, %v690
      %v723 = vadd.f32 %v626, %v691
      %v724 = vadd.f32 %v627, %v692
      %v725 = vadd.f32 %v628, %v693
      %v726 = vadd.f32 %v629, %v694
      %v727 = vadd.f32 %v630, %v695
      %v728 = vadd.f32 %v631, %v696
      %v729 = vadd.f32 %v632, %v697
      %v730 = vadd.f32 %v633, %v698
      %v731 = vadd.f32 %v634, %v699
      %v732 = vadd.f32 %v635, %v700
      %v733 = vadd.f32 %v636, %v701
      %v734 = vadd.f32 %v637, %v702
      %v735 = vadd.f32 %v638, %v703
      %v736 = vadd.f32 %v639, %v704
      %v737 = vadd.f32 %v640, %v705
      %v738 = vadd.f32 %v641, %v706
      %v739 = vadd.f32 %v642, %v707
      %v740 = vadd.f32 %v643, %v708
      %v741 = vadd.f32 %v644, %v709
      %v742 = vadd.f32 %v645, %v710
      %v743 = vadd.f32 %v646, %v711
      %v744 = vadd.f32 %v647, %v712
      %v745 = vadd.f32 %v648, %v713
      %v746 = vadd.f32 %v649, %v714
      %v747 = vadd.f32 %v650, %v715
      %v748 = vadd.f32 %v651, %v716
      %v749 = vadd.f32 %v652, %v717
      %v750 = vadd.f32 %v653, %v718
      %v751 = vadd.f32 %v654, %v719
      %v752 = vadd.f32 %v655, %v720
      %v753 = vld [vmem:[%s558 + $0x2] sm:$0xff]
      %v754 = vld [vmem:[%s558 + $0xa] sm:$0xff]
      %v755 = vld [vmem:[%s558 + $0x1a] sm:$0xff]
      %v756 = vld [vmem:[%s558 + $0x22] sm:$0xff]
      %v757 = vld [vmem:[%s558 + $0x32] sm:$0xff]
      %v758 = vld [vmem:[%s558 + $0x3a] sm:$0xff]
      %v759 = vld [vmem:[%s558 + $0x4a] sm:$0xff]
      %v760 = vld [vmem:[%s558 + $0x52] sm:$0xff]
      %v761 = vld [vmem:[%s558 + $0x62] sm:$0xff]
      %v762 = vld [vmem:[%s558 + $0x6a] sm:$0xff]
      %v763 = vld [vmem:[%s558 + $0x7a] sm:$0xff]
      %v764 = vld [vmem:[%s558 + $0x82] sm:$0xff]
      %v765 = vld [vmem:[%s558 + $0x92] sm:$0xff]
      %v766 = vld [vmem:[%s558 + $0x9a] sm:$0xff]
      %v767 = vld [vmem:[%s558 + $0xaa] sm:$0xff]
      %v768 = vld [vmem:[%s558 + $0xb2] sm:$0xff]
      %v769 = vld [vmem:[%s558 + $0xc2] sm:$0xff]
      %v770 = vld [vmem:[%s558 + $0xca] sm:$0xff]
      %v771 = vld [vmem:[%s558 + $0xda] sm:$0xff]
      %v772 = vld [vmem:[%s558 + $0xe2] sm:$0xff]
      %v773 = vld [vmem:[%s558 + $0xf2] sm:$0xff]
      %v774 = vld [vmem:[%s558 + $0xfa] sm:$0xff]
      %v775 = vld [vmem:[%s558 + $0x10a] sm:$0xff]
      %v776 = vld [vmem:[%s558 + $0x112] sm:$0xff]
      %v777 = vld [vmem:[%s558 + $0x122] sm:$0xff]
      %v778 = vld [vmem:[%s558 + $0x12a] sm:$0xff]
      %v779 = vld [vmem:[%s558 + $0x13a] sm:$0xff]
      %v780 = vld [vmem:[%s558 + $0x142] sm:$0xff]
      %v781 = vld [vmem:[%s558 + $0x152] sm:$0xff]
      %v782 = vld [vmem:[%s558 + $0x15a] sm:$0xff]
      %v783 = vld [vmem:[%s558 + $0x16a] sm:$0xff]
      %v784 = vld [vmem:[%s558 + $0x172] sm:$0xff]
      %v785 = vperm.slane %v265, 5
      %v786 = vmul.f32 %v753, %v785
      %v787 = vmul.f32 %v754, %v785
      %v788 = vmul.f32 %v755, %v785
      %v789 = vmul.f32 %v756, %v785
      %v790 = vmul.f32 %v757, %v785
      %v791 = vmul.f32 %v758, %v785
      %v792 = vmul.f32 %v759, %v785
      %v793 = vmul.f32 %v760, %v785
      %v794 = vmul.f32 %v761, %v785
      %v795 = vmul.f32 %v762, %v785
      %v796 = vmul.f32 %v763, %v785
      %v797 = vmul.f32 %v764, %v785
      %v798 = vmul.f32 %v765, %v785
      %v799 = vmul.f32 %v766, %v785
      %v800 = vmul.f32 %v767, %v785
      %v801 = vmul.f32 %v768, %v785
      %v802 = vmul.f32 %v769, %v785
      %v803 = vmul.f32 %v770, %v785
      %v804 = vmul.f32 %v771, %v785
      %v805 = vmul.f32 %v772, %v785
      %v806 = vmul.f32 %v773, %v785
      %v807 = vmul.f32 %v774, %v785
      %v808 = vmul.f32 %v775, %v785
      %v809 = vmul.f32 %v776, %v785
      %v810 = vmul.f32 %v777, %v785
      %v811 = vmul.f32 %v778, %v785
      %v812 = vmul.f32 %v779, %v785
      %v813 = vmul.f32 %v780, %v785
      %v814 = vmul.f32 %v781, %v785
      %v815 = vmul.f32 %v782, %v785
      %v816 = vmul.f32 %v783, %v785
      %v817 = vmul.f32 %v784, %v785
      %v818 = vadd.f32 %v721, %v786
      %v819 = vadd.f32 %v722, %v787
      %v820 = vadd.f32 %v723, %v788
      %v821 = vadd.f32 %v724, %v789
      %v822 = vadd.f32 %v725, %v790
      %v823 = vadd.f32 %v726, %v791
      %v824 = vadd.f32 %v727, %v792
      %v825 = vadd.f32 %v728, %v793
      %v826 = vadd.f32 %v729, %v794
      %v827 = vadd.f32 %v730, %v795
      %v828 = vadd.f32 %v731, %v796
      %v829 = vadd.f32 %v732, %v797
      %v830 = vadd.f32 %v733, %v798
      %v831 = vadd.f32 %v734, %v799
      %v832 = vadd.f32 %v735, %v800
      %v833 = vadd.f32 %v736, %v801
      %v834 = vadd.f32 %v737, %v802
      %v835 = vadd.f32 %v738, %v803
      %v836 = vadd.f32 %v739, %v804
      %v837 = vadd.f32 %v740, %v805
      %v838 = vadd.f32 %v741, %v806
      %v839 = vadd.f32 %v742, %v807
      %v840 = vadd.f32 %v743, %v808
      %v841 = vadd.f32 %v744, %v809
      %v842 = vadd.f32 %v745, %v810
      %v843 = vadd.f32 %v746, %v811
      %v844 = vadd.f32 %v747, %v812
      %v845 = vadd.f32 %v748, %v813
      %v846 = vadd.f32 %v749, %v814
      %v847 = vadd.f32 %v750, %v815
      %v848 = vadd.f32 %v751, %v816
      %v849 = vadd.f32 %v752, %v817
      %s850 = scalar_lea.vmem %s249, 48
      %v851 = vld [vmem:[%s850] sm:$0xff]
      %v852 = vld [vmem:[%s850 + $0x8] sm:$0xff]
      %v853 = vld [vmem:[%s850 + $0x18] sm:$0xff]
      %v854 = vld [vmem:[%s850 + $0x20] sm:$0xff]
      %v855 = vld [vmem:[%s850 + $0x30] sm:$0xff]
      %v856 = vld [vmem:[%s850 + $0x38] sm:$0xff]
      %v857 = vld [vmem:[%s850 + $0x48] sm:$0xff]
      %v858 = vld [vmem:[%s850 + $0x50] sm:$0xff]
      %v859 = vld [vmem:[%s850 + $0x60] sm:$0xff]
      %v860 = vld [vmem:[%s850 + $0x68] sm:$0xff]
      %v861 = vld [vmem:[%s850 + $0x78] sm:$0xff]
      %v862 = vld [vmem:[%s850 + $0x80] sm:$0xff]
      %v863 = vld [vmem:[%s850 + $0x90] sm:$0xff]
      %v864 = vld [vmem:[%s850 + $0x98] sm:$0xff]
      %v865 = vld [vmem:[%s850 + $0xa8] sm:$0xff]
      %v866 = vld [vmem:[%s850 + $0xb0] sm:$0xff]
      %v867 = vld [vmem:[%s850 + $0xc0] sm:$0xff]
      %v868 = vld [vmem:[%s850 + $0xc8] sm:$0xff]
      %v869 = vld [vmem:[%s850 + $0xd8] sm:$0xff]
      %v870 = vld [vmem:[%s850 + $0xe0] sm:$0xff]
      %v871 = vld [vmem:[%s850 + $0xf0] sm:$0xff]
      %v872 = vld [vmem:[%s850 + $0xf8] sm:$0xff]
      %v873 = vld [vmem:[%s850 + $0x108] sm:$0xff]
      %v874 = vld [vmem:[%s850 + $0x110] sm:$0xff]
      %v875 = vld [vmem:[%s850 + $0x120] sm:$0xff]
      %v876 = vld [vmem:[%s850 + $0x128] sm:$0xff]
      %v877 = vld [vmem:[%s850 + $0x138] sm:$0xff]
      %v878 = vld [vmem:[%s850 + $0x140] sm:$0xff]
      %v879 = vld [vmem:[%s850 + $0x150] sm:$0xff]
      %v880 = vld [vmem:[%s850 + $0x158] sm:$0xff]
      %v881 = vld [vmem:[%s850 + $0x168] sm:$0xff]
      %v882 = vld [vmem:[%s850 + $0x170] sm:$0xff]
      %v883 = vperm.slane %v265, 6
      %v884 = vmul.f32 %v851, %v883
      %v885 = vmul.f32 %v852, %v883
      %v886 = vmul.f32 %v853, %v883
      %v887 = vmul.f32 %v854, %v883
      %v888 = vmul.f32 %v855, %v883
      %v889 = vmul.f32 %v856, %v883
      %v890 = vmul.f32 %v857, %v883
      %v891 = vmul.f32 %v858, %v883
      %v892 = vmul.f32 %v859, %v883
      %v893 = vmul.f32 %v860, %v883
      %v894 = vmul.f32 %v861, %v883
      %v895 = vmul.f32 %v862, %v883
      %v896 = vmul.f32 %v863, %v883
      %v897 = vmul.f32 %v864, %v883
      %v898 = vmul.f32 %v865, %v883
      %v899 = vmul.f32 %v866, %v883
      %v900 = vmul.f32 %v867, %v883
      %v901 = vmul.f32 %v868, %v883
      %v902 = vmul.f32 %v869, %v883
      %v903 = vmul.f32 %v870, %v883
      %v904 = vmul.f32 %v871, %v883
      %v905 = vmul.f32 %v872, %v883
      %v906 = vmul.f32 %v873, %v883
      %v907 = vmul.f32 %v874, %v883
      %v908 = vmul.f32 %v875, %v883
      %v909 = vmul.f32 %v876, %v883
      %v910 = vmul.f32 %v877, %v883
      %v911 = vmul.f32 %v878, %v883
      %v912 = vmul.f32 %v879, %v883
      %v913 = vmul.f32 %v880, %v883
      %v914 = vmul.f32 %v881, %v883
      %v915 = vmul.f32 %v882, %v883
      %v916 = vadd.f32 %v818, %v884
      %v917 = vadd.f32 %v819, %v885
      %v918 = vadd.f32 %v820, %v886
      %v919 = vadd.f32 %v821, %v887
      %v920 = vadd.f32 %v822, %v888
      %v921 = vadd.f32 %v823, %v889
      %v922 = vadd.f32 %v824, %v890
      %v923 = vadd.f32 %v825, %v891
      %v924 = vadd.f32 %v826, %v892
      %v925 = vadd.f32 %v827, %v893
      %v926 = vadd.f32 %v828, %v894
      %v927 = vadd.f32 %v829, %v895
      %v928 = vadd.f32 %v830, %v896
      %v929 = vadd.f32 %v831, %v897
      %v930 = vadd.f32 %v832, %v898
      %v931 = vadd.f32 %v833, %v899
      %v932 = vadd.f32 %v834, %v900
      %v933 = vadd.f32 %v835, %v901
      %v934 = vadd.f32 %v836, %v902
      %v935 = vadd.f32 %v837, %v903
      %v936 = vadd.f32 %v838, %v904
      %v937 = vadd.f32 %v839, %v905
      %v938 = vadd.f32 %v840, %v906
      %v939 = vadd.f32 %v841, %v907
      %v940 = vadd.f32 %v842, %v908
      %v941 = vadd.f32 %v843, %v909
      %v942 = vadd.f32 %v844, %v910
      %v943 = vadd.f32 %v845, %v911
      %v944 = vadd.f32 %v846, %v912
      %v945 = vadd.f32 %v847, %v913
      %v946 = vadd.f32 %v848, %v914
      %v947 = vadd.f32 %v849, %v915
      %v948 = vld [vmem:[%s850 + $0x1] sm:$0xff]
      %v949 = vld [vmem:[%s850 + $0x9] sm:$0xff]
      %v950 = vld [vmem:[%s850 + $0x19] sm:$0xff]
      %v951 = vld [vmem:[%s850 + $0x21] sm:$0xff]
      %v952 = vld [vmem:[%s850 + $0x31] sm:$0xff]
      %v953 = vld [vmem:[%s850 + $0x39] sm:$0xff]
      %v954 = vld [vmem:[%s850 + $0x49] sm:$0xff]
      %v955 = vld [vmem:[%s850 + $0x51] sm:$0xff]
      %v956 = vld [vmem:[%s850 + $0x61] sm:$0xff]
      %v957 = vld [vmem:[%s850 + $0x69] sm:$0xff]
      %v958 = vld [vmem:[%s850 + $0x79] sm:$0xff]
      %v959 = vld [vmem:[%s850 + $0x81] sm:$0xff]
      %v960 = vld [vmem:[%s850 + $0x91] sm:$0xff]
      %v961 = vld [vmem:[%s850 + $0x99] sm:$0xff]
      %v962 = vld [vmem:[%s850 + $0xa9] sm:$0xff]
      %v963 = vld [vmem:[%s850 + $0xb1] sm:$0xff]
      %v964 = vld [vmem:[%s850 + $0xc1] sm:$0xff]
      %v965 = vld [vmem:[%s850 + $0xc9] sm:$0xff]
      %v966 = vld [vmem:[%s850 + $0xd9] sm:$0xff]
      %v967 = vld [vmem:[%s850 + $0xe1] sm:$0xff]
      %v968 = vld [vmem:[%s850 + $0xf1] sm:$0xff]
      %v969 = vld [vmem:[%s850 + $0xf9] sm:$0xff]
      %v970 = vld [vmem:[%s850 + $0x109] sm:$0xff]
      %v971 = vld [vmem:[%s850 + $0x111] sm:$0xff]
      %v972 = vld [vmem:[%s850 + $0x121] sm:$0xff]
      %v973 = vld [vmem:[%s850 + $0x129] sm:$0xff]
      %v974 = vld [vmem:[%s850 + $0x139] sm:$0xff]
      %v975 = vld [vmem:[%s850 + $0x141] sm:$0xff]
      %v976 = vld [vmem:[%s850 + $0x151] sm:$0xff]
      %v977 = vld [vmem:[%s850 + $0x159] sm:$0xff]
      %v978 = vld [vmem:[%s850 + $0x169] sm:$0xff]
      %v979 = vld [vmem:[%s850 + $0x171] sm:$0xff]
      %v980 = vperm.slane %v265, 7
      %v981 = vmul.f32 %v948, %v980
      %v982 = vmul.f32 %v949, %v980
      %v983 = vmul.f32 %v950, %v980
      %v984 = vmul.f32 %v951, %v980
      %v985 = vmul.f32 %v952, %v980
      %v986 = vmul.f32 %v953, %v980
      %v987 = vmul.f32 %v954, %v980
      %v988 = vmul.f32 %v955, %v980
      %v989 = vmul.f32 %v956, %v980
      %v990 = vmul.f32 %v957, %v980
      %v991 = vmul.f32 %v958, %v980
      %v992 = vmul.f32 %v959, %v980
      %v993 = vmul.f32 %v960, %v980
      %v994 = vmul.f32 %v961, %v980
      %v995 = vmul.f32 %v962, %v980
      %v996 = vmul.f32 %v963, %v980
      %v997 = vmul.f32 %v964, %v980
      %v998 = vmul.f32 %v965, %v980
      %v999 = vmul.f32 %v966, %v980
      %v1000 = vmul.f32 %v967, %v980
      %v1001 = vmul.f32 %v968, %v980
      %v1002 = vmul.f32 %v969, %v980
      %v1003 = vmul.f32 %v970, %v980
      %v1004 = vmul.f32 %v971, %v980
      %v1005 = vmul.f32 %v972, %v980
      %v1006 = vmul.f32 %v973, %v980
      %v1007 = vmul.f32 %v974, %v980
      %v1008 = vmul.f32 %v975, %v980
      %v1009 = vmul.f32 %v976, %v980
      %v1010 = vmul.f32 %v977, %v980
      %v1011 = vmul.f32 %v978, %v980
      %v1012 = vmul.f32 %v979, %v980
      %v1013 = vadd.f32 %v916, %v981
      %v1014 = vadd.f32 %v917, %v982
      %v1015 = vadd.f32 %v918, %v983
      %v1016 = vadd.f32 %v919, %v984
      %v1017 = vadd.f32 %v920, %v985
      %v1018 = vadd.f32 %v921, %v986
      %v1019 = vadd.f32 %v922, %v987
      %v1020 = vadd.f32 %v923, %v988
      %v1021 = vadd.f32 %v924, %v989
      %v1022 = vadd.f32 %v925, %v990
      %v1023 = vadd.f32 %v926, %v991
      %v1024 = vadd.f32 %v927, %v992
      %v1025 = vadd.f32 %v928, %v993
      %v1026 = vadd.f32 %v929, %v994
      %v1027 = vadd.f32 %v930, %v995
      %v1028 = vadd.f32 %v931, %v996
      %v1029 = vadd.f32 %v932, %v997
      %v1030 = vadd.f32 %v933, %v998
      %v1031 = vadd.f32 %v934, %v999
      %v1032 = vadd.f32 %v935, %v1000
      %v1033 = vadd.f32 %v936, %v1001
      %v1034 = vadd.f32 %v937, %v1002
      %v1035 = vadd.f32 %v938, %v1003
      %v1036 = vadd.f32 %v939, %v1004
      %v1037 = vadd.f32 %v940, %v1005
      %v1038 = vadd.f32 %v941, %v1006
      %v1039 = vadd.f32 %v942, %v1007
      %v1040 = vadd.f32 %v943, %v1008
      %v1041 = vadd.f32 %v944, %v1009
      %v1042 = vadd.f32 %v945, %v1010
      %v1043 = vadd.f32 %v946, %v1011
      %v1044 = vadd.f32 %v947, %v1012
      %v1045 = vld [vmem:[%s850 + $0x2] sm:$0xff]
      %v1046 = vld [vmem:[%s850 + $0xa] sm:$0xff]
      %v1047 = vld [vmem:[%s850 + $0x1a] sm:$0xff]
      %v1048 = vld [vmem:[%s850 + $0x22] sm:$0xff]
      %v1049 = vld [vmem:[%s850 + $0x32] sm:$0xff]
      %v1050 = vld [vmem:[%s850 + $0x3a] sm:$0xff]
      %v1051 = vld [vmem:[%s850 + $0x4a] sm:$0xff]
      %v1052 = vld [vmem:[%s850 + $0x52] sm:$0xff]
      %v1053 = vld [vmem:[%s850 + $0x62] sm:$0xff]
      %v1054 = vld [vmem:[%s850 + $0x6a] sm:$0xff]
      %v1055 = vld [vmem:[%s850 + $0x7a] sm:$0xff]
      %v1056 = vld [vmem:[%s850 + $0x82] sm:$0xff]
      %v1057 = vld [vmem:[%s850 + $0x92] sm:$0xff]
      %v1058 = vld [vmem:[%s850 + $0x9a] sm:$0xff]
      %v1059 = vld [vmem:[%s850 + $0xaa] sm:$0xff]
      %v1060 = vld [vmem:[%s850 + $0xb2] sm:$0xff]
      %v1061 = vld [vmem:[%s850 + $0xc2] sm:$0xff]
      %v1062 = vld [vmem:[%s850 + $0xca] sm:$0xff]
      %v1063 = vld [vmem:[%s850 + $0xda] sm:$0xff]
      %v1064 = vld [vmem:[%s850 + $0xe2] sm:$0xff]
      %v1065 = vld [vmem:[%s850 + $0xf2] sm:$0xff]
      %v1066 = vld [vmem:[%s850 + $0xfa] sm:$0xff]
      %v1067 = vld [vmem:[%s850 + $0x10a] sm:$0xff]
      %v1068 = vld [vmem:[%s850 + $0x112] sm:$0xff]
      %v1069 = vld [vmem:[%s850 + $0x122] sm:$0xff]
      %v1070 = vld [vmem:[%s850 + $0x12a] sm:$0xff]
      %v1071 = vld [vmem:[%s850 + $0x13a] sm:$0xff]
      %v1072 = vld [vmem:[%s850 + $0x142] sm:$0xff]
      %v1073 = vld [vmem:[%s850 + $0x152] sm:$0xff]
      %v1074 = vld [vmem:[%s850 + $0x15a] sm:$0xff]
      %v1075 = vld [vmem:[%s850 + $0x16a] sm:$0xff]
      %v1076 = vld [vmem:[%s850 + $0x172] sm:$0xff]
      %v1077 = vperm.slane %v266, 0
      %v1078 = vmul.f32 %v1045, %v1077
      %v1079 = vmul.f32 %v1046, %v1077
      %v1080 = vmul.f32 %v1047, %v1077
      %v1081 = vmul.f32 %v1048, %v1077
      %v1082 = vmul.f32 %v1049, %v1077
      %v1083 = vmul.f32 %v1050, %v1077
      %v1084 = vmul.f32 %v1051, %v1077
      %v1085 = vmul.f32 %v1052, %v1077
      %v1086 = vmul.f32 %v1053, %v1077
      %v1087 = vmul.f32 %v1054, %v1077
      %v1088 = vmul.f32 %v1055, %v1077
      %v1089 = vmul.f32 %v1056, %v1077
      %v1090 = vmul.f32 %v1057, %v1077
      %v1091 = vmul.f32 %v1058, %v1077
      %v1092 = vmul.f32 %v1059, %v1077
      %v1093 = vmul.f32 %v1060, %v1077
      %v1094 = vmul.f32 %v1061, %v1077
      %v1095 = vmul.f32 %v1062, %v1077
      %v1096 = vmul.f32 %v1063, %v1077
      %v1097 = vmul.f32 %v1064, %v1077
      %v1098 = vmul.f32 %v1065, %v1077
      %v1099 = vmul.f32 %v1066, %v1077
      %v1100 = vmul.f32 %v1067, %v1077
      %v1101 = vmul.f32 %v1068, %v1077
      %v1102 = vmul.f32 %v1069, %v1077
      %v1103 = vmul.f32 %v1070, %v1077
      %v1104 = vmul.f32 %v1071, %v1077
      %v1105 = vmul.f32 %v1072, %v1077
      %v1106 = vmul.f32 %v1073, %v1077
      %v1107 = vmul.f32 %v1074, %v1077
      %v1108 = vmul.f32 %v1075, %v1077
      %v1109 = vmul.f32 %v1076, %v1077
      %v1110 = vadd.f32 %v1013, %v1078
      %v1111 = vadd.f32 %v1014, %v1079
      %v1112 = vadd.f32 %v1015, %v1080
      %v1113 = vadd.f32 %v1016, %v1081
      %v1114 = vadd.f32 %v1017, %v1082
      %v1115 = vadd.f32 %v1018, %v1083
      %v1116 = vadd.f32 %v1019, %v1084
      %v1117 = vadd.f32 %v1020, %v1085
      %v1118 = vadd.f32 %v1021, %v1086
      %v1119 = vadd.f32 %v1022, %v1087
      %v1120 = vadd.f32 %v1023, %v1088
      %v1121 = vadd.f32 %v1024, %v1089
      %v1122 = vadd.f32 %v1025, %v1090
      %v1123 = vadd.f32 %v1026, %v1091
      %v1124 = vadd.f32 %v1027, %v1092
      %v1125 = vadd.f32 %v1028, %v1093
      %v1126 = vadd.f32 %v1029, %v1094
      %v1127 = vadd.f32 %v1030, %v1095
      %v1128 = vadd.f32 %v1031, %v1096
      %v1129 = vadd.f32 %v1032, %v1097
      %v1130 = vadd.f32 %v1033, %v1098
      %v1131 = vadd.f32 %v1034, %v1099
      %v1132 = vadd.f32 %v1035, %v1100
      %v1133 = vadd.f32 %v1036, %v1101
      %v1134 = vadd.f32 %v1037, %v1102
      %v1135 = vadd.f32 %v1038, %v1103
      %v1136 = vadd.f32 %v1039, %v1104
      %v1137 = vadd.f32 %v1040, %v1105
      %v1138 = vadd.f32 %v1041, %v1106
      %v1139 = vadd.f32 %v1042, %v1107
      %v1140 = vadd.f32 %v1043, %v1108
      %v1141 = vadd.f32 %v1044, %v1109
      %v1142 = vld [vmem:[%s2] sm:$0xf]
      %v1143 = vld [vmem:[%s259] sm:$0xff]
      %v1144 = vld [vmem:[%s259 + $0x8] sm:$0xff]
      %v1145 = vld [vmem:[%s259 + $0x10] sm:$0xff]
      %v1146 = vld [vmem:[%s259 + $0x18] sm:$0xff]
      %v1147 = vld [vmem:[%s259 + $0x20] sm:$0xff]
      %v1148 = vld [vmem:[%s259 + $0x28] sm:$0xff]
      %v1149 = vld [vmem:[%s259 + $0x30] sm:$0xff]
      %v1150 = vld [vmem:[%s259 + $0x38] sm:$0xff]
      %v1151 = vld [vmem:[%s259 + $0x40] sm:$0xff]
      %v1152 = vld [vmem:[%s259 + $0x48] sm:$0xff]
      %v1153 = vld [vmem:[%s259 + $0x50] sm:$0xff]
      %v1154 = vld [vmem:[%s259 + $0x58] sm:$0xff]
      %v1155 = vld [vmem:[%s259 + $0x60] sm:$0xff]
      %v1156 = vld [vmem:[%s259 + $0x68] sm:$0xff]
      %v1157 = vld [vmem:[%s259 + $0x70] sm:$0xff]
      %v1158 = vld [vmem:[%s259 + $0x78] sm:$0xff]
      %v1159 = vld [vmem:[%s259 + $0x80] sm:$0xff]
      %v1160 = vld [vmem:[%s259 + $0x88] sm:$0xff]
      %v1161 = vld [vmem:[%s259 + $0x90] sm:$0xff]
      %v1162 = vld [vmem:[%s259 + $0x98] sm:$0xff]
      %v1163 = vld [vmem:[%s259 + $0xa0] sm:$0xff]
      %v1164 = vld [vmem:[%s259 + $0xa8] sm:$0xff]
      %v1165 = vld [vmem:[%s259 + $0xb0] sm:$0xff]
      %v1166 = vld [vmem:[%s259 + $0xb8] sm:$0xff]
      %v1167 = vld [vmem:[%s259 + $0xc0] sm:$0xff]
      %v1168 = vld [vmem:[%s259 + $0xc8] sm:$0xff]
      %v1169 = vld [vmem:[%s259 + $0xd0] sm:$0xff]
      %v1170 = vld [vmem:[%s259 + $0xd8] sm:$0xff]
      %v1171 = vld [vmem:[%s259 + $0xe0] sm:$0xff]
      %v1172 = vld [vmem:[%s259 + $0xe8] sm:$0xff]
      %v1173 = vld [vmem:[%s259 + $0xf0] sm:$0xff]
      %v1174 = vld [vmem:[%s259 + $0xf8] sm:$0xff]
      %1176 = vset.pattern.permute.xlu0 0
      %1177 = vperm.xlu0 %1176, %v1143
      %v1178 = vpop.permute.xlu0 %1177
      %1181 = vset.pattern.permute.xlu0 0
      %1182 = vperm.xlu0 %1181, %v1144
      %v1183 = vpop.permute.xlu0 %1182
      %1186 = vset.pattern.permute.xlu0 0
      %1187 = vperm.xlu0 %1186, %v1145
      %v1188 = vpop.permute.xlu0 %1187
      %1191 = vset.pattern.permute.xlu0 0
      %1192 = vperm.xlu0 %1191, %v1146
      %v1193 = vpop.permute.xlu0 %1192
      %1196 = vset.pattern.permute.xlu0 0
      %1197 = vperm.xlu0 %1196, %v1147
      %v1198 = vpop.permute.xlu0 %1197
      %1201 = vset.pattern.permute.xlu0 0
      %1202 = vperm.xlu0 %1201, %v1148
      %v1203 = vpop.permute.xlu0 %1202
      %1206 = vset.pattern.permute.xlu0 0
      %1207 = vperm.xlu0 %1206, %v1149
      %v1208 = vpop.permute.xlu0 %1207
      %1211 = vset.pattern.permute.xlu0 0
      %1212 = vperm.xlu0 %1211, %v1150
      %v1213 = vpop.permute.xlu0 %1212
      %1216 = vset.pattern.permute.xlu0 0
      %1217 = vperm.xlu0 %1216, %v1151
      %v1218 = vpop.permute.xlu0 %1217
      %1221 = vset.pattern.permute.xlu0 0
      %1222 = vperm.xlu0 %1221, %v1152
      %v1223 = vpop.permute.xlu0 %1222
      %1226 = vset.pattern.permute.xlu0 0
      %1227 = vperm.xlu0 %1226, %v1153
      %v1228 = vpop.permute.xlu0 %1227
      %1231 = vset.pattern.permute.xlu0 0
      %1232 = vperm.xlu0 %1231, %v1154
      %v1233 = vpop.permute.xlu0 %1232
      %1236 = vset.pattern.permute.xlu0 0
      %1237 = vperm.xlu0 %1236, %v1155
      %v1238 = vpop.permute.xlu0 %1237
      %1241 = vset.pattern.permute.xlu0 0
      %1242 = vperm.xlu0 %1241, %v1156
      %v1243 = vpop.permute.xlu0 %1242
      %1246 = vset.pattern.permute.xlu0 0
      %1247 = vperm.xlu0 %1246, %v1157
      %v1248 = vpop.permute.xlu0 %1247
      %1251 = vset.pattern.permute.xlu0 0
      %1252 = vperm.xlu0 %1251, %v1158
      %v1253 = vpop.permute.xlu0 %1252
      %1256 = vset.pattern.permute.xlu0 0
      %1257 = vperm.xlu0 %1256, %v1159
      %v1258 = vpop.permute.xlu0 %1257
      %1261 = vset.pattern.permute.xlu0 0
      %1262 = vperm.xlu0 %1261, %v1160
      %v1263 = vpop.permute.xlu0 %1262
      %1266 = vset.pattern.permute.xlu0 0
      %1267 = vperm.xlu0 %1266, %v1161
      %v1268 = vpop.permute.xlu0 %1267
      %1271 = vset.pattern.permute.xlu0 0
      %1272 = vperm.xlu0 %1271, %v1162
      %v1273 = vpop.permute.xlu0 %1272
      %1276 = vset.pattern.permute.xlu0 0
      %1277 = vperm.xlu0 %1276, %v1163
      %v1278 = vpop.permute.xlu0 %1277
      %1281 = vset.pattern.permute.xlu0 0
      %1282 = vperm.xlu0 %1281, %v1164
      %v1283 = vpop.permute.xlu0 %1282
      %1286 = vset.pattern.permute.xlu0 0
      %1287 = vperm.xlu0 %1286, %v1165
      %v1288 = vpop.permute.xlu0 %1287
      %1291 = vset.pattern.permute.xlu0 0
      %1292 = vperm.xlu0 %1291, %v1166
      %v1293 = vpop.permute.xlu0 %1292
      %1296 = vset.pattern.permute.xlu0 0
      %1297 = vperm.xlu0 %1296, %v1167
      %v1298 = vpop.permute.xlu0 %1297
      %1301 = vset.pattern.permute.xlu0 0
      %1302 = vperm.xlu0 %1301, %v1168
      %v1303 = vpop.permute.xlu0 %1302
      %1306 = vset.pattern.permute.xlu0 0
      %1307 = vperm.xlu0 %1306, %v1169
      %v1308 = vpop.permute.xlu0 %1307
      %1311 = vset.pattern.permute.xlu0 0
      %1312 = vperm.xlu0 %1311, %v1170
      %v1313 = vpop.permute.xlu0 %1312
      %1316 = vset.pattern.permute.xlu0 0
      %1317 = vperm.xlu0 %1316, %v1171
      %v1318 = vpop.permute.xlu0 %1317
      %1321 = vset.pattern.permute.xlu0 0
      %1322 = vperm.xlu0 %1321, %v1172
      %v1323 = vpop.permute.xlu0 %1322
      %1326 = vset.pattern.permute.xlu0 0
      %1327 = vperm.xlu0 %1326, %v1173
      %v1328 = vpop.permute.xlu0 %1327
      %1331 = vset.pattern.permute.xlu0 0
      %1332 = vperm.xlu0 %1331, %v1174
      %v1333 = vpop.permute.xlu0 %1332
      %vm1335 = vcmask 31744
      %v1337 = vsel %vm1335, %v1110, 0
      %v1340 = vsel %vm1335, %v1111, 0
      %v1343 = vsel %vm1335, %v1112, 0
      %v1346 = vsel %vm1335, %v1113, 0
      %v1349 = vsel %vm1335, %v1114, 0
      %v1352 = vsel %vm1335, %v1115, 0
      %v1355 = vsel %vm1335, %v1116, 0
      %v1358 = vsel %vm1335, %v1117, 0
      %v1361 = vsel %vm1335, %v1118, 0
      %v1364 = vsel %vm1335, %v1119, 0
      %v1367 = vsel %vm1335, %v1120, 0
      %v1370 = vsel %vm1335, %v1121, 0
      %v1373 = vsel %vm1335, %v1122, 0
      %v1376 = vsel %vm1335, %v1123, 0
      %v1379 = vsel %vm1335, %v1124, 0
      %v1382 = vsel %vm1335, %v1125, 0
      %v1385 = vsel %vm1335, %v1126, 0
      %v1388 = vsel %vm1335, %v1127, 0
      %v1391 = vsel %vm1335, %v1128, 0
      %v1394 = vsel %vm1335, %v1129, 0
      %v1397 = vsel %vm1335, %v1130, 0
      %v1400 = vsel %vm1335, %v1131, 0
      %v1403 = vsel %vm1335, %v1132, 0
      %v1406 = vsel %vm1335, %v1133, 0
      %v1409 = vsel %vm1335, %v1134, 0
      %v1412 = vsel %vm1335, %v1135, 0
      %v1415 = vsel %vm1335, %v1136, 0
      %v1418 = vsel %vm1335, %v1137, 0
      %v1421 = vsel %vm1335, %v1138, 0
      %v1424 = vsel %vm1335, %v1139, 0
      %v1427 = vsel %vm1335, %v1140, 0
      %v1430 = vsel %vm1335, %v1141, 0
      %vm1432 = vcmask 1043456
      %v1434 = vsel %vm1432, %v1142, 0
      %1436 = vmatpush.msra.mxu0 0.0
      %1437 = vmatpush.msra.mxu0 0.0
      %1438 = vmatpush.msra.mxu0 0.0
      %1439 = vmatpush.msra.mxu0 0.0
      %1440 = vmatpush.msra.mxu0 0.0
      %1441 = vmatpush.msra.mxu0 0.0
      %1442 = vmatpush.msra.mxu0 0.0
      %1443 = vmatpush.msra.mxu0 0.0
      %1444 = vmatpush.msra.mxu0 0.0
      %1445 = vmatpush.msra.mxu0 0.0
      %1446 = vmatpush.msra.mxu0 0.0
      %1447 = vmatpush.msra.mxu0 0.0
      %1448 = vmatpush.msra.mxu0 0.0
      %1449 = vmatpush.msra.mxu0 0.0
      %1450 = vmatpush.msra.mxu0 0.0
      %1451 = vmatpush.msra.mxu0 %v1434
      %1452 = vmatmul.f32.gmra.mxu0 %v1337
      %v1453 = vpop.f32.mrf.mxu0
      %v1454 = vadd.f32 %v1178, %v1453
      %1455 = vmatmul.f32.gmra.mxu0 %v1340
      %v1456 = vpop.f32.mrf.mxu0
      %v1457 = vadd.f32 %v1183, %v1456
      %1458 = vmatmul.f32.gmra.mxu0 %v1343
      %v1459 = vpop.f32.mrf.mxu0
      %v1460 = vadd.f32 %v1188, %v1459
      %1461 = vmatmul.f32.gmra.mxu0 %v1346
      %v1462 = vpop.f32.mrf.mxu0
      %v1463 = vadd.f32 %v1193, %v1462
      %1464 = vmatmul.f32.gmra.mxu0 %v1349
      %v1465 = vpop.f32.mrf.mxu0
      %v1466 = vadd.f32 %v1198, %v1465
      %1467 = vmatmul.f32.gmra.mxu0 %v1352
      %v1468 = vpop.f32.mrf.mxu0
      %v1469 = vadd.f32 %v1203, %v1468
      %1470 = vmatmul.f32.gmra.mxu0 %v1355
      %v1471 = vpop.f32.mrf.mxu0
      %v1472 = vadd.f32 %v1208, %v1471
      %1473 = vmatmul.f32.gmra.mxu0 %v1358
      %v1474 = vpop.f32.mrf.mxu0
      %v1475 = vadd.f32 %v1213, %v1474
      %1476 = vmatmul.f32.gmra.mxu0 %v1361
      %v1477 = vpop.f32.mrf.mxu0
      %v1478 = vadd.f32 %v1218, %v1477
      %1479 = vmatmul.f32.gmra.mxu0 %v1364
      %v1480 = vpop.f32.mrf.mxu0
      %v1481 = vadd.f32 %v1223, %v1480
      %1482 = vmatmul.f32.gmra.mxu0 %v1367
      %v1483 = vpop.f32.mrf.mxu0
      %v1484 = vadd.f32 %v1228, %v1483
      %1485 = vmatmul.f32.gmra.mxu0 %v1370
      %v1486 = vpop.f32.mrf.mxu0
      %v1487 = vadd.f32 %v1233, %v1486
      %1488 = vmatmul.f32.gmra.mxu0 %v1373
      %v1489 = vpop.f32.mrf.mxu0
      %v1490 = vadd.f32 %v1238, %v1489
      %1491 = vmatmul.f32.gmra.mxu0 %v1376
      %v1492 = vpop.f32.mrf.mxu0
      %v1493 = vadd.f32 %v1243, %v1492
      %1494 = vmatmul.f32.gmra.mxu0 %v1379
      %v1495 = vpop.f32.mrf.mxu0
      %v1496 = vadd.f32 %v1248, %v1495
      %1497 = vmatmul.f32.gmra.mxu0 %v1382
      %v1498 = vpop.f32.mrf.mxu0
      %v1499 = vadd.f32 %v1253, %v1498
      %1500 = vmatmul.f32.gmra.mxu0 %v1385
      %v1501 = vpop.f32.mrf.mxu0
      %v1502 = vadd.f32 %v1258, %v1501
      %1503 = vmatmul.f32.gmra.mxu0 %v1388
      %v1504 = vpop.f32.mrf.mxu0
      %v1505 = vadd.f32 %v1263, %v1504
      %1506 = vmatmul.f32.gmra.mxu0 %v1391
      %v1507 = vpop.f32.mrf.mxu0
      %v1508 = vadd.f32 %v1268, %v1507
      %1509 = vmatmul.f32.gmra.mxu0 %v1394
      %v1510 = vpop.f32.mrf.mxu0
      %v1511 = vadd.f32 %v1273, %v1510
      %1512 = vmatmul.f32.gmra.mxu0 %v1397
      %v1513 = vpop.f32.mrf.mxu0
      %v1514 = vadd.f32 %v1278, %v1513
      %1515 = vmatmul.f32.gmra.mxu0 %v1400
      %v1516 = vpop.f32.mrf.mxu0
      %v1517 = vadd.f32 %v1283, %v1516
      %1518 = vmatmul.f32.gmra.mxu0 %v1403
      %v1519 = vpop.f32.mrf.mxu0
      %v1520 = vadd.f32 %v1288, %v1519
      %1521 = vmatmul.f32.gmra.mxu0 %v1406
      %v1522 = vpop.f32.mrf.mxu0
      %v1523 = vadd.f32 %v1293, %v1522
      %1524 = vmatmul.f32.gmra.mxu0 %v1409
      %v1525 = vpop.f32.mrf.mxu0
      %v1526 = vadd.f32 %v1298, %v1525
      %1527 = vmatmul.f32.gmra.mxu0 %v1412
      %v1528 = vpop.f32.mrf.mxu0
      %v1529 = vadd.f32 %v1303, %v1528
      %1530 = vmatmul.f32.gmra.mxu0 %v1415
      %v1531 = vpop.f32.mrf.mxu0
      %v1532 = vadd.f32 %v1308, %v1531
      %1533 = vmatmul.f32.gmra.mxu0 %v1418
      %v1534 = vpop.f32.mrf.mxu0
      %v1535 = vadd.f32 %v1313, %v1534
      %1536 = vmatmul.f32.gmra.mxu0 %v1421
      %v1537 = vpop.f32.mrf.mxu0
      %v1538 = vadd.f32 %v1318, %v1537
      %1539 = vmatmul.f32.gmra.mxu0 %v1424
      %v1540 = vpop.f32.mrf.mxu0
      %v1541 = vadd.f32 %v1323, %v1540
      %1542 = vmatmul.f32.gmra.mxu0 %v1427
      %v1543 = vpop.f32.mrf.mxu0
      %v1544 = vadd.f32 %v1328, %v1543
      %1545 = vmatmul.f32.gmra.mxu0 %v1430
      %v1546 = vpop.f32.mrf.mxu0
      %v1547 = vadd.f32 %v1333, %v1546
      %1548 = vdwg.mxu0
      %v1549 = vld [vmem:[%s4] sm:$0x1]
      %v1551 = vperm.slane %v1549, 0
      %v1553 = vadd.f32 %v1454, %v1551
      %v1554 = vadd.f32 %v1457, %v1551
      %v1555 = vadd.f32 %v1460, %v1551
      %v1556 = vadd.f32 %v1463, %v1551
      %v1557 = vadd.f32 %v1466, %v1551
      %v1558 = vadd.f32 %v1469, %v1551
      %v1559 = vadd.f32 %v1472, %v1551
      %v1560 = vadd.f32 %v1475, %v1551
      %v1561 = vadd.f32 %v1478, %v1551
      %v1562 = vadd.f32 %v1481, %v1551
      %v1563 = vadd.f32 %v1484, %v1551
      %v1564 = vadd.f32 %v1487, %v1551
      %v1565 = vadd.f32 %v1490, %v1551
      %v1566 = vadd.f32 %v1493, %v1551
      %v1567 = vadd.f32 %v1496, %v1551
      %v1568 = vadd.f32 %v1499, %v1551
      %v1569 = vadd.f32 %v1502, %v1551
      %v1570 = vadd.f32 %v1505, %v1551
      %v1571 = vadd.f32 %v1508, %v1551
      %v1572 = vadd.f32 %v1511, %v1551
      %v1573 = vadd.f32 %v1514, %v1551
      %v1574 = vadd.f32 %v1517, %v1551
      %v1575 = vadd.f32 %v1520, %v1551
      %v1576 = vadd.f32 %v1523, %v1551
      %v1577 = vadd.f32 %v1526, %v1551
      %v1578 = vadd.f32 %v1529, %v1551
      %v1579 = vadd.f32 %v1532, %v1551
      %v1580 = vadd.f32 %v1535, %v1551
      %v1581 = vadd.f32 %v1538, %v1551
      %v1582 = vadd.f32 %v1541, %v1551
      %v1583 = vadd.f32 %v1544, %v1551
      %v1584 = vadd.f32 %v1547, %v1551
      %vm1585 = vcmp.ge.f32.partialorder %v1553, 0.0
      %vm1586 = vcmp.ge.f32.partialorder %v1554, 0.0
      %vm1587 = vcmp.ge.f32.partialorder %v1555, 0.0
      %vm1588 = vcmp.ge.f32.partialorder %v1556, 0.0
      %vm1589 = vcmp.ge.f32.partialorder %v1557, 0.0
      %vm1590 = vcmp.ge.f32.partialorder %v1558, 0.0
      %vm1591 = vcmp.ge.f32.partialorder %v1559, 0.0
      %vm1592 = vcmp.ge.f32.partialorder %v1560, 0.0
      %vm1593 = vcmp.ge.f32.partialorder %v1561, 0.0
      %vm1594 = vcmp.ge.f32.partialorder %v1562, 0.0
      %vm1595 = vcmp.ge.f32.partialorder %v1563, 0.0
      %vm1596 = vcmp.ge.f32.partialorder %v1564, 0.0
      %vm1597 = vcmp.ge.f32.partialorder %v1565, 0.0
      %vm1598 = vcmp.ge.f32.partialorder %v1566, 0.0
      %vm1599 = vcmp.ge.f32.partialorder %v1567, 0.0
      %vm1600 = vcmp.ge.f32.partialorder %v1568, 0.0
      %vm1601 = vcmp.ge.f32.partialorder %v1569, 0.0
      %vm1602 = vcmp.ge.f32.partialorder %v1570, 0.0
      %vm1603 = vcmp.ge.f32.partialorder %v1571, 0.0
      %vm1604 = vcmp.ge.f32.partialorder %v1572, 0.0
      %vm1605 = vcmp.ge.f32.partialorder %v1573, 0.0
      %vm1606 = vcmp.ge.f32.partialorder %v1574, 0.0
      %vm1607 = vcmp.ge.f32.partialorder %v1575, 0.0
      %vm1608 = vcmp.ge.f32.partialorder %v1576, 0.0
      %vm1609 = vcmp.ge.f32.partialorder %v1577, 0.0
      %vm1610 = vcmp.ge.f32.partialorder %v1578, 0.0
      %vm1611 = vcmp.ge.f32.partialorder %v1579, 0.0
      %vm1612 = vcmp.ge.f32.partialorder %v1580, 0.0
      %vm1613 = vcmp.ge.f32.partialorder %v1581, 0.0
      %vm1614 = vcmp.ge.f32.partialorder %v1582, 0.0
      %vm1615 = vcmp.ge.f32.partialorder %v1583, 0.0
      %vm1616 = vcmp.ge.f32.partialorder %v1584, 0.0
      %v1617 = vmul.f32 %v1553, 0.2
      %v1618 = vmul.f32 %v1554, 0.2
      %v1619 = vmul.f32 %v1555, 0.2
      %v1620 = vmul.f32 %v1556, 0.2
      %v1621 = vmul.f32 %v1557, 0.2
      %v1622 = vmul.f32 %v1558, 0.2
      %v1623 = vmul.f32 %v1559, 0.2
      %v1624 = vmul.f32 %v1560, 0.2
      %v1625 = vmul.f32 %v1561, 0.2
      %v1626 = vmul.f32 %v1562, 0.2
      %v1627 = vmul.f32 %v1563, 0.2
      %v1628 = vmul.f32 %v1564, 0.2
      %v1629 = vmul.f32 %v1565, 0.2
      %v1630 = vmul.f32 %v1566, 0.2
      %v1631 = vmul.f32 %v1567, 0.2
      %v1632 = vmul.f32 %v1568, 0.2
      %v1633 = vmul.f32 %v1569, 0.2
      %v1634 = vmul.f32 %v1570, 0.2
      %v1635 = vmul.f32 %v1571, 0.2
      %v1636 = vmul.f32 %v1572, 0.2
      %v1637 = vmul.f32 %v1573, 0.2
      %v1638 = vmul.f32 %v1574, 0.2
      %v1639 = vmul.f32 %v1575, 0.2
      %v1640 = vmul.f32 %v1576, 0.2
      %v1641 = vmul.f32 %v1577, 0.2
      %v1642 = vmul.f32 %v1578, 0.2
      %v1643 = vmul.f32 %v1579, 0.2
      %v1644 = vmul.f32 %v1580, 0.2
      %v1645 = vmul.f32 %v1581, 0.2
      %v1646 = vmul.f32 %v1582, 0.2
      %v1647 = vmul.f32 %v1583, 0.2
      %v1648 = vmul.f32 %v1584, 0.2
      %v1649 = vsel %vm1585, %v1553, %v1617
      %v1650 = vsel %vm1586, %v1554, %v1618
      %v1651 = vsel %vm1587, %v1555, %v1619
      %v1652 = vsel %vm1588, %v1556, %v1620
      %v1653 = vsel %vm1589, %v1557, %v1621
      %v1654 = vsel %vm1590, %v1558, %v1622
      %v1655 = vsel %vm1591, %v1559, %v1623
      %v1656 = vsel %vm1592, %v1560, %v1624
      %v1657 = vsel %vm1593, %v1561, %v1625
      %v1658 = vsel %vm1594, %v1562, %v1626
      %v1659 = vsel %vm1595, %v1563, %v1627
      %v1660 = vsel %vm1596, %v1564, %v1628
      %v1661 = vsel %vm1597, %v1565, %v1629
      %v1662 = vsel %vm1598, %v1566, %v1630
      %v1663 = vsel %vm1599, %v1567, %v1631
      %v1664 = vsel %vm1600, %v1568, %v1632
      %v1665 = vsel %vm1601, %v1569, %v1633
      %v1666 = vsel %vm1602, %v1570, %v1634
      %v1667 = vsel %vm1603, %v1571, %v1635
      %v1668 = vsel %vm1604, %v1572, %v1636
      %v1669 = vsel %vm1605, %v1573, %v1637
      %v1670 = vsel %vm1606, %v1574, %v1638
      %v1671 = vsel %vm1607, %v1575, %v1639
      %v1672 = vsel %vm1608, %v1576, %v1640
      %v1673 = vsel %vm1609, %v1577, %v1641
      %v1674 = vsel %vm1610, %v1578, %v1642
      %v1675 = vsel %vm1611, %v1579, %v1643
      %v1676 = vsel %vm1612, %v1580, %v1644
      %v1677 = vsel %vm1613, %v1581, %v1645
      %v1678 = vsel %vm1614, %v1582, %v1646
      %v1679 = vsel %vm1615, %v1583, %v1647
      %v1680 = vsel %vm1616, %v1584, %v1648
      %vm1681 = vcmask 64512
      %1682 = vst.msk [vmem:[%s264] sm:$0xff] %vm1681, %v1649
      %1683 = vst.msk [vmem:[%s264 + $0x8] sm:$0xff] %vm1681, %v1650
      %1684 = vst.msk [vmem:[%s264 + $0x10] sm:$0xff] %vm1681, %v1651
      %1685 = vst.msk [vmem:[%s264 + $0x18] sm:$0xff] %vm1681, %v1652
      %1686 = vst.msk [vmem:[%s264 + $0x20] sm:$0xff] %vm1681, %v1653
      %1687 = vst.msk [vmem:[%s264 + $0x28] sm:$0xff] %vm1681, %v1654
      %1688 = vst.msk [vmem:[%s264 + $0x30] sm:$0xff] %vm1681, %v1655
      %1689 = vst.msk [vmem:[%s264 + $0x38] sm:$0xff] %vm1681, %v1656
      %1690 = vst.msk [vmem:[%s264 + $0x40] sm:$0xff] %vm1681, %v1657
      %1691 = vst.msk [vmem:[%s264 + $0x48] sm:$0xff] %vm1681, %v1658
      %1692 = vst.msk [vmem:[%s264 + $0x50] sm:$0xff] %vm1681, %v1659
      %1693 = vst.msk [vmem:[%s264 + $0x58] sm:$0xff] %vm1681, %v1660
      %1694 = vst.msk [vmem:[%s264 + $0x60] sm:$0xff] %vm1681, %v1661
      %1695 = vst.msk [vmem:[%s264 + $0x68] sm:$0xff] %vm1681, %v1662
      %1696 = vst.msk [vmem:[%s264 + $0x70] sm:$0xff] %vm1681, %v1663
      %1697 = vst.msk [vmem:[%s264 + $0x78] sm:$0xff] %vm1681, %v1664
      %1698 = vst.msk [vmem:[%s264 + $0x80] sm:$0xff] %vm1681, %v1665
      %1699 = vst.msk [vmem:[%s264 + $0x88] sm:$0xff] %vm1681, %v1666
      %1700 = vst.msk [vmem:[%s264 + $0x90] sm:$0xff] %vm1681, %v1667
      %1701 = vst.msk [vmem:[%s264 + $0x98] sm:$0xff] %vm1681, %v1668
      %1702 = vst.msk [vmem:[%s264 + $0xa0] sm:$0xff] %vm1681, %v1669
      %1703 = vst.msk [vmem:[%s264 + $0xa8] sm:$0xff] %vm1681, %v1670
      %1704 = vst.msk [vmem:[%s264 + $0xb0] sm:$0xff] %vm1681, %v1671
      %1705 = vst.msk [vmem:[%s264 + $0xb8] sm:$0xff] %vm1681, %v1672
      %1706 = vst.msk [vmem:[%s264 + $0xc0] sm:$0xff] %vm1681, %v1673
      %1707 = vst.msk [vmem:[%s264 + $0xc8] sm:$0xff] %vm1681, %v1674
      %1708 = vst.msk [vmem:[%s264 + $0xd0] sm:$0xff] %vm1681, %v1675
      %1709 = vst.msk [vmem:[%s264 + $0xd8] sm:$0xff] %vm1681, %v1676
      %1710 = vst.msk [vmem:[%s264 + $0xe0] sm:$0xff] %vm1681, %v1677
      %1711 = vst.msk [vmem:[%s264 + $0xe8] sm:$0xff] %vm1681, %v1678
      %1712 = vst.msk [vmem:[%s264 + $0xf0] sm:$0xff] %vm1681, %v1679
      %1713 = vst.msk [vmem:[%s264 + $0xf8] sm:$0xff] %vm1681, %v1680
      %p1714 = scmp.lt.s32.totalorder %s16, 1
      %s1715 = scalar_select %p1714, %s16, 1
      %s1716 = smul.addr %s1715, 32
      %s1717 = smul.addr %s1716, 8
      %s1718 = scalar_lea.vmem %s5, %s1717
      // Predicated region
      $region41: #{tpu_custom_call.1} parent=39 // pred_check
        %p1719 = pneg %p154
      $region42: #{tpu_custom_call.1} parent=39 // pred_check_branch
        %1721 = sbr.rel (%p1719) target = $region44
      $region43: #{tpu_custom_call.1} parent=39 // pred_region
        _
      $region44: #{tpu_custom_call.1} parent=39 // pred_fallthru
        _
    $region40: #{tpu_custom_call.1} parent=5 // pred_fallthru
      _
    %p1722 = scmp.le.s32.totalorder 2, %s11
    // Predicated region
    $region45: #{tpu_custom_call.1} parent=5 // pred_check
      %p1723 = pneg %p1722
    $region46: #{tpu_custom_call.1} parent=5 // pred_check_branch
      %1725 = sbr.rel (%p1723) target = $region48
    $region47: #{tpu_custom_call.1} parent=5 // pred_region
      %s1726 = ssub.s32 %s11, 2
      // Predicated region
      $region49: #{tpu_custom_call.1} parent=47 // pred_check
        %p1727 = pneg %p160
      $region50: #{tpu_custom_call.1} parent=47 // pred_check_branch
        %1729 = sbr.rel (%p1727) target = $region52
      $region51: #{tpu_custom_call.1} parent=47 // pred_region
        %p1730 = scmp.lt.s32.totalorder %s17, 1
        %s1731 = scalar_select %p1730, %s17, 1
        %s1732 = smul.addr %s1731, 32
        %s1733 = smul.addr %s1732, 8
        %s1734 = scalar_lea.vmem %s5, %s1733
      $region52: #{tpu_custom_call.1} parent=47 // pred_fallthru
        _
    $region48: #{tpu_custom_call.1} parent=5 // pred_fallthru
      _
  $region6: #{tpu_custom_call.1} parent=0 // loop_footer
    %s15 = sadd.s32 1, %s11
  $region7: #{tpu_custom_call.1} parent=0 // loop_footer_branch
    %10 = sbr.rel target = $region3
  $region8: #{tpu_custom_call.1} parent=0 // loop_exit
    _

</llo_original>
